<compile_context>
chip_gen: v7x
topology: tpu7x:2x2x1
jax: 0.10.0
libtpu: 0.0.40
codegen_flags: <defaults>
</compile_context>

<pallas_src>
import jax
import jax.numpy as jnp
from jax.experimental import pallas as pl
from jax.experimental.pallas import tpu as pltpu


def _round_up(x, m):
    return ((x + m - 1) // m) * m


def _encoder_kernel(patches_ref, wc_ref, bc_ref, wf_ref, bf_ref, out_ref):
    # patches_ref block: (Tt, B, P, Kp) bf16 -> a chunk of timesteps.
    tt, b, p, kp = patches_ref.shape
    fp = wc_ref.shape[1]
    embp = wf_ref.shape[1]

    # Conv-as-matmul: one big lane-dense MXU matmul over all rows in the block
    # (M = Tt*B*P), instead of B tiny batched matmuls.
    rows = patches_ref[...].reshape(tt * b * p, kp)                     # (M, Kp) bf16
    h = jnp.dot(rows, wc_ref[...], preferred_element_type=jnp.float32)  # (M, Fp) f32
    h = jnp.maximum(h + bc_ref[...], 0.0)                               # bias + ReLU

    # Global average pool: cross-sublane sum (XLU) + constant 1/P scale (VPU).
    pooled = jnp.sum(h.reshape(tt * b, p, fp), axis=1) * (1.0 / p)      # (Tt*B, Fp)

    # Fused FC: (Tt*B, Fp) x (Fp, EMBp) + bias; EMBp = 384 gives unmasked
    # lane-dense output stores.
    y = jnp.dot(pooled, wf_ref[...], preferred_element_type=jnp.float32)
    y = y + bf_ref[...]
    out_ref[...] = y.reshape(tt, b, embp).astype(out_ref.dtype)


def init_params(key, cin=3, feat=64, emb=300):
    k1, k2, k3, k4 = jax.random.split(key, 4)
    # conv weight stored as (kh, kw, cin, feat) then flattened to (9*cin, feat)
    wc = (jax.random.normal(k1, (3, 3, cin, feat), jnp.float32) * 0.05
          ).reshape(9 * cin, feat)
    bc = jax.random.normal(k2, (1, feat), jnp.float32) * 0.01
    wf = jax.random.normal(k3, (feat, emb), jnp.float32) * 0.05
    bf = jax.random.normal(k4, (1, emb), jnp.float32) * 0.01
    return wc, bc, wf, bf


def _im2col_frames(x_3d, k_pad=None):
    """(B, T, C, H, W) -> (T, B, H*W, Kp) patches for a 3x3 'same' conv."""
    B, T, C, H, W = x_3d.shape
    x = jnp.transpose(x_3d, (1, 0, 3, 4, 2))                    # (T, B, H, W, C)
    xp = jnp.pad(x, ((0, 0), (0, 0), (1, 1), (1, 1), (0, 0)))
    cols = []
    for kh in range(3):
        for kw in range(3):
            cols.append(xp[:, :, kh:kh + H, kw:kw + W, :])
    patches = jnp.concatenate(cols, axis=-1)                    # (T, B, H, W, 9C)
    patches = patches.reshape(T, B, H * W, 9 * C)
    if k_pad is not None and k_pad > 9 * C:
        patches = jnp.pad(
            patches, ((0, 0), (0, 0), (0, 0), (0, k_pad - 9 * C)))
    return patches


@jax.jit
def encoder_cnn_forward(x_3d, wc, bc, wf, bf):
    B, T, C, H, W = x_3d.shape
    P = H * W
    K, F = wc.shape
    EMB = wf.shape[1]

    # Lane/MXU-friendly padded sizes (pads are zero, so results are exact).
    Kp = _round_up(K, 32)        # 27 -> 32  (sublane-aligned contraction dim)
    Fp = _round_up(F, 128)       # 64 -> 128 (lane-dense conv output)
    EMBp = _round_up(EMB, 128)   # 300 -> 384 (unmasked output stores)

    # bf16 activations / conv weight (f32 accumulation on the MXU); FC kept f32.
    patches = _im2col_frames(x_3d.astype(jnp.bfloat16), Kp)     # (T, B, P, Kp)
    wc_p = jnp.zeros((Kp, Fp), jnp.bfloat16).at[:K, :F].set(
        wc.astype(jnp.bfloat16))
    bc_p = jnp.zeros((1, Fp), jnp.float32).at[:, :F].set(bc)
    wf_p = jnp.zeros((Fp, EMBp), jnp.float32).at[:F, :EMB].set(wf)
    bf_p = jnp.zeros((1, EMBp), jnp.float32).at[:, :EMB].set(bf)

    # Several timesteps per grid step: big MXU matmuls, amortized per-step
    # overhead, and >= 2 parallel steps so both v7x TensorCores get work.
    tt = T // 2 if (T % 2 == 0 and T >= 2) else T
    grid = (T // tt,)

    kernel = pl.pallas_call(
        _encoder_kernel,
        out_shape=jax.ShapeDtypeStruct((T, B, EMBp), jnp.float32),
        grid_spec=pltpu.PrefetchScalarGridSpec(
            num_scalar_prefetch=0,
            grid=grid,
            in_specs=[
                pl.BlockSpec((tt, B, P, Kp), lambda t: (t, 0, 0, 0)),
                pl.BlockSpec((Kp, Fp), lambda t: (0, 0)),
                pl.BlockSpec((1, Fp), lambda t: (0, 0)),
                pl.BlockSpec((Fp, EMBp), lambda t: (0, 0)),
                pl.BlockSpec((1, EMBp), lambda t: (0, 0)),
            ],
            out_specs=pl.BlockSpec((tt, B, EMBp), lambda t: (t, 0, 0)),
        ),
        compiler_params=pltpu.CompilerParams(
            dimension_semantics=("parallel",)),
    )
    out_padded = kernel(patches, wc_p, bc_p, wf_p, bf_p)        # (T, B, EMBp)
    return out_padded[:, :, :EMB]                               # (T, B, 300)


def _reference(x_3d, wc, bc, wf, bf):
    """Plain-JAX reference with the same bf16 input rounding, f32 math."""
    x = x_3d.astype(jnp.bfloat16).astype(jnp.float32)
    wcf = wc.astype(jnp.bfloat16).astype(jnp.float32)
    patches = _im2col_frames(x)                                 # (T, B, P, K)
    h = jnp.einsum("tbpk,kf->tbpf", patches, wcf,
                   precision=jax.lax.Precision.HIGHEST) + bc
    h = jnp.maximum(h, 0.0)
    pooled = jnp.mean(h, axis=2)                                # (T, B, F)
    return jnp.einsum("tbf,fe->tbe", pooled, wf,
                      precision=jax.lax.Precision.HIGHEST) + bf


if __name__ == "__main__":
    key = jax.random.PRNGKey(0)
    kx, kp = jax.random.split(key)

    B, T, C, H, W = 2, 4, 3, 16, 16
    x_3d = jax.random.normal(kx, (B, T, C, H, W), jnp.float32)
    wc, bc, wf, bf = init_params(kp, cin=C, feat=64, emb=300)

    out = encoder_cnn_forward(x_3d, wc, bc, wf, bf)
    out = jax.block_until_ready(out)

    assert out.shape == (T, B, 300), out.shape
    ref = _reference(x_3d, wc, bc, wf, bf)
    err = float(jnp.max(jnp.abs(out - ref)))
    assert jnp.allclose(out, ref, rtol=2e-3, atol=2e-3), err

    print("KERNEL_OK")
</pallas_src>

<mosaic_0001>
module attributes {stable_mosaic.version = 11 : i64} {
  func.func @_encoder_kernel(%arg0: i32, %arg1: memref<2x2x256x32xbf16, #tpu.memory_space<vmem>>, %arg2: memref<32x128xbf16, #tpu.memory_space<vmem>>, %arg3: memref<1x128xf32, #tpu.memory_space<vmem>>, %arg4: memref<128x384xf32, #tpu.memory_space<vmem>>, %arg5: memref<1x384xf32, #tpu.memory_space<vmem>>, %arg6: memref<2x2x384xf32, #tpu.memory_space<vmem>>) attributes {dimension_semantics = [#tpu.dimension_semantics<parallel>], iteration_bounds = array<i64: 2>, scalar_prefetch = 0 : i64, scratch_operands = 0 : i64, tpu.core_type = #tpu.core_type<tc>, window_params = [{transform_indices = @transform_0, window_bounds = array<i64: 2, 2, 256, 32>}, {pipeline_mode = #tpu.pipeline_mode<synchronous>, transform_indices = @transform_1, window_bounds = array<i64: 32, 128>}, {pipeline_mode = #tpu.pipeline_mode<synchronous>, transform_indices = @transform_2, window_bounds = array<i64: 1, 128>}, {pipeline_mode = #tpu.pipeline_mode<synchronous>, transform_indices = @transform_3, window_bounds = array<i64: 128, 384>}, {pipeline_mode = #tpu.pipeline_mode<synchronous>, transform_indices = @transform_4, window_bounds = array<i64: 1, 384>}, {transform_indices = @transform_5, window_bounds = array<i64: 2, 2, 384>}]} {
    %c0 = arith.constant 0 : index
    %c0_0 = arith.constant 0 : index
    %c0_1 = arith.constant 0 : index
    %c0_2 = arith.constant 0 : index
    %0 = vector.load %arg1[%c0, %c0_0, %c0_1, %c0_2] : memref<2x2x256x32xbf16, #tpu.memory_space<vmem>>, vector<2x2x256x32xbf16>
    %1 = vector.shape_cast %0 : vector<2x2x256x32xbf16> to vector<1024x32xbf16>
    %c0_3 = arith.constant 0 : index
    %c0_4 = arith.constant 0 : index
    %2 = vector.load %arg2[%c0_3, %c0_4] : memref<32x128xbf16, #tpu.memory_space<vmem>>, vector<32x128xbf16>
    %cst = arith.constant dense<0.000000e+00> : vector<1024x128xf32>
    %3 = tpu.matmul %1, %2, %cst {dimension_numbers = #tpu.dot_dimension_numbers<[1], [0], [0], [1], [0, 0, 1, 1], [], []>} : vector<1024x32xbf16>, vector<32x128xbf16>, vector<1024x128xf32> -> vector<1024x128xf32>
    %c0_5 = arith.constant 0 : index
    %c0_6 = arith.constant 0 : index
    %4 = vector.load %arg3[%c0_5, %c0_6] : memref<1x128xf32, #tpu.memory_space<vmem>>, vector<1x128xf32>
    %5 = vector.broadcast %4 : vector<1x128xf32> to vector<1024x128xf32>
    %6 = arith.addf %3, %5 : vector<1024x128xf32>
    %cst_7 = arith.constant 0.000000e+00 : f32
    %7 = vector.broadcast %cst_7 : f32 to vector<1024x128xf32>
    %8 = arith.maximumf %6, %7 : vector<1024x128xf32>
    %9 = vector.shape_cast %8 : vector<1024x128xf32> to vector<4x256x128xf32>
    %cst_8 = arith.constant dense<0.000000e+00> : vector<4x128xf32>
    %10 = vector.multi_reduction <add>, %9, %cst_8 [1] : vector<4x256x128xf32> to vector<4x128xf32>
    %cst_9 = arith.constant 3.906250e-03 : f32
    %11 = vector.broadcast %cst_9 : f32 to vector<4x128xf32>
    %12 = arith.mulf %10, %11 : vector<4x128xf32>
    %c0_10 = arith.constant 0 : index
    %c0_11 = arith.constant 0 : index
    %13 = vector.load %arg4[%c0_10, %c0_11] : memref<128x384xf32, #tpu.memory_space<vmem>>, vector<128x384xf32>
    %cst_12 = arith.constant dense<0.000000e+00> : vector<4x384xf32>
    %14 = tpu.matmul %12, %13, %cst_12 {dimension_numbers = #tpu.dot_dimension_numbers<[1], [0], [0], [1], [0, 0, 1, 1], [], []>} : vector<4x128xf32>, vector<128x384xf32>, vector<4x384xf32> -> vector<4x384xf32>
    %c0_13 = arith.constant 0 : index
    %c0_14 = arith.constant 0 : index
    %15 = vector.load %arg5[%c0_13, %c0_14] : memref<1x384xf32, #tpu.memory_space<vmem>>, vector<1x384xf32>
    %16 = vector.broadcast %15 : vector<1x384xf32> to vector<4x384xf32>
    %17 = arith.addf %14, %16 : vector<4x384xf32>
    %18 = vector.shape_cast %17 : vector<4x384xf32> to vector<2x2x384xf32>
    %c0_15 = arith.constant 0 : index
    %c0_16 = arith.constant 0 : index
    %c0_17 = arith.constant 0 : index
    %19 = vector.load %arg6[%c0_15, %c0_16, %c0_17] : memref<2x2x384xf32, #tpu.memory_space<vmem>>, vector<2x2x384xf32>
    tpu.vector_store %arg6[%c0_15, %c0_16, %c0_17], %18 {strides = array<i32>} : memref<2x2x384xf32, #tpu.memory_space<vmem>>, vector<2x2x384xf32>,
    return
  }
  func.func @transform_0(%arg0: i32) -> (i32, i32, i32, i32) {
    %c0_i32 = arith.constant 0 : i32
    %c0_i32_0 = arith.constant 0 : i32
    %c0_i32_1 = arith.constant 0 : i32
    %c0_i32_2 = arith.constant 0 : i32
    return %arg0, %c0_i32, %c0_i32_0, %c0_i32_1 : i32, i32, i32, i32
  }
  func.func @transform_1(%arg0: i32) -> (i32, i32) {
    %c0_i32 = arith.constant 0 : i32
    %c0_i32_0 = arith.constant 0 : i32
    %c0_i32_1 = arith.constant 0 : i32
    return %c0_i32, %c0_i32_0 : i32, i32
  }
  func.func @transform_2(%arg0: i32) -> (i32, i32) {
    %c0_i32 = arith.constant 0 : i32
    %c0_i32_0 = arith.constant 0 : i32
    %c0_i32_1 = arith.constant 0 : i32
    return %c0_i32, %c0_i32_0 : i32, i32
  }
  func.func @transform_3(%arg0: i32) -> (i32, i32) {
    %c0_i32 = arith.constant 0 : i32
    %c0_i32_0 = arith.constant 0 : i32
    %c0_i32_1 = arith.constant 0 : i32
    return %c0_i32, %c0_i32_0 : i32, i32
  }
  func.func @transform_4(%arg0: i32) -> (i32, i32) {
    %c0_i32 = arith.constant 0 : i32
    %c0_i32_0 = arith.constant 0 : i32
    %c0_i32_1 = arith.constant 0 : i32
    return %c0_i32, %c0_i32_0 : i32, i32
  }
  func.func @transform_5(%arg0: i32) -> (i32, i32, i32) {
    %c0_i32 = arith.constant 0 : i32
    %c0_i32_0 = arith.constant 0 : i32
    %c0_i32_1 = arith.constant 0 : i32
    return %arg0, %c0_i32, %c0_i32_0 : i32, i32, i32
  }
}

</mosaic_0001>

<llo_original>
// kernel: encoder_cnn_forward.1
$region0: #{encoder_cnn_forward.1}
  #allocation0 [shape = 'u32[]', space=smem, size = 0x4, offset = 0x4, fixed_abs, tag = 'smem constant byte address 0x4 - core index']
  #allocation1 [shape = 'u32[144,128]{1,0:T(1,128)}', space=vmem, size = 0x12000, scoped, tag = 'internal scratch']
  %s0 = inlined_call_operand.vmem [shape: bf16[4,2,256,32], index: 0, kind: input, shape index: {}]
  %s1 = inlined_call_operand.vmem [shape: bf16[32,128], index: 1, kind: input, shape index: {}]
  %s2 = inlined_call_operand.vmem [shape: f32[1,128], index: 2, kind: input, shape index: {}]
  %s3 = inlined_call_operand.vmem [shape: f32[128,384], index: 3, kind: input, shape index: {}]
  %s4 = inlined_call_operand.vmem [shape: f32[1,384], index: 4, kind: input, shape index: {}]
  %s5 = inlined_call_operand.hbm [shape: f32[4,2,384], index: 5, kind: output, shape index: {}]
  %s6 = sld [smem:[#allocation0]]
  $region53: #{encoder_cnn_forward.1} parent=0
    _
  %s8 = ssub.s32 1, %s6
  %s9 = scalar_select 0, %s8, %s6
  $region1: #{encoder_cnn_forward.1} parent=0
    #allocation2 [shape = 'u8[12288]{0}', space=vmem, size = 0x3000, scoped, tag = 'output window, operand 0']
    #allocation3 [shape = 's32[2]{0}', space=sflag, size = 0x8, scoped, tag = 'scoped memory for encoder_cnn_forward.1']
    %10 = vsyncpa [#allocation3], 0
    %s11 = scalar_lea.sflag [#allocation3], 1
    %12 = vsyncpa %s11, 0
    loop: start=0, step=1, limit=4
    $region2: #{encoder_cnn_forward.1} parent=1 // loop_pre_header
      _
    $region3: #{encoder_cnn_forward.1} parent=1 // loop_header
      %s14 = sphi 0, %s18
      %p15 = scmp.ge.s32.totalorder %s14, 4
      %s24 = sphi 0, %s26
      %s27 = sphi 0, %s24
      %s28 = sphi 0, %s27
      %s44 = sphi 0, %s28
      %s48 = sphi 0, %s48
      %s50 = sphi 0, %s48
      %s51 = sphi 0, %s50
      %s65 = sphi 0, %s51
      %s69 = sphi 0, %s69
      %s71 = sphi 0, %s69
      %s72 = sphi 0, %s71
      %s86 = sphi 0, %s72
      %s90 = sphi 0, %s90
      %s92 = sphi 0, %s90
      %s93 = sphi 0, %s92
      %s107 = sphi 0, %s93
      %s111 = sphi 0, %s111
      %s113 = sphi 0, %s111
      %s114 = sphi 0, %s113
      %s128 = sphi 0, %s114
      %s134 = sphi 0, %s136
      %s137 = sphi 0, %s134
      %s138 = sphi 0, %s137
      %s154 = sphi 0, %s138
    $region4: #{encoder_cnn_forward.1} parent=1 // loop_header_branch
      %17 = sbr.rel (%p15) target = $region8
    $region5: #{encoder_cnn_forward.1} parent=1 // loop_body
      %s19 = ssub.s32 %s14, 1
      %s20 = ssub.s32 %s14, 2
      %s21 = sadd.s32 %s14, 1
      %s22 = ssub.s32 %s14, %s21
      %p23 = scmp.eq.s32.totalorder %s22, 0
      %s25 = sadd.s32 %s24, 1
      %s26 = scalar_select %p23, %s24, %s25
      %p29 = pneg %p23
      %p30 = scmp.eq.s32.totalorder %s14, 1
      %p31 = por %p29, %p30
      %p32 = scmp.ne.s32.totalorder %s24, %s27
      %p33 = scmp.eq.s32.totalorder %s14, 0
      %p34 = por %p32, %p33
      %p35 = scmp.ne.s32.totalorder %s24, %s27
      %p36 = scmp.eq.s32.totalorder %s19, 1
      %p37 = por %p35, %p36
      %p38 = scmp.ne.s32.totalorder %s27, %s28
      %p39 = scmp.eq.s32.totalorder %s19, 0
      %p40 = por %p38, %p39
      %p41 = scmp.ne.s32.totalorder %s27, %s28
      %p42 = scmp.eq.s32.totalorder %s20, 1
      %p43 = por %p41, %p42
      %p45 = scmp.ne.s32.totalorder %s28, %s44
      %p46 = scmp.eq.s32.totalorder %s20, 0
      %p47 = por %p45, %p46
      %s49 = sadd.s32 %s48, 1
      %p52 = scmp.eq.s32.totalorder %s14, 1
      %p53 = scmp.ne.s32.totalorder %s48, %s50
      %p54 = scmp.eq.s32.totalorder %s14, 0
      %p55 = por %p53, %p54
      %p56 = scmp.ne.s32.totalorder %s48, %s50
      %p57 = scmp.eq.s32.totalorder %s19, 1
      %p58 = por %p56, %p57
      %p59 = scmp.ne.s32.totalorder %s50, %s51
      %p60 = scmp.eq.s32.totalorder %s19, 0
      %p61 = por %p59, %p60
      %p62 = scmp.ne.s32.totalorder %s50, %s51
      %p63 = scmp.eq.s32.totalorder %s20, 1
      %p64 = por %p62, %p63
      %p66 = scmp.ne.s32.totalorder %s51, %s65
      %p67 = scmp.eq.s32.totalorder %s20, 0
      %p68 = por %p66, %p67
      %s70 = sadd.s32 %s69, 1
      %p73 = scmp.eq.s32.totalorder %s14, 1
      %p74 = scmp.ne.s32.totalorder %s69, %s71
      %p75 = scmp.eq.s32.totalorder %s14, 0
      %p76 = por %p74, %p75
      %p77 = scmp.ne.s32.totalorder %s69, %s71
      %p78 = scmp.eq.s32.totalorder %s19, 1
      %p79 = por %p77, %p78
      %p80 = scmp.ne.s32.totalorder %s71, %s72
      %p81 = scmp.eq.s32.totalorder %s19, 0
      %p82 = por %p80, %p81
      %p83 = scmp.ne.s32.totalorder %s71, %s72
      %p84 = scmp.eq.s32.totalorder %s20, 1
      %p85 = por %p83, %p84
      %p87 = scmp.ne.s32.totalorder %s72, %s86
      %p88 = scmp.eq.s32.totalorder %s20, 0
      %p89 = por %p87, %p88
      %s91 = sadd.s32 %s90, 1
      %p94 = scmp.eq.s32.totalorder %s14, 1
      %p95 = scmp.ne.s32.totalorder %s90, %s92
      %p96 = scmp.eq.s32.totalorder %s14, 0
      %p97 = por %p95, %p96
      %p98 = scmp.ne.s32.totalorder %s90, %s92
      %p99 = scmp.eq.s32.totalorder %s19, 1
      %p100 = por %p98, %p99
      %p101 = scmp.ne.s32.totalorder %s92, %s93
      %p102 = scmp.eq.s32.totalorder %s19, 0
      %p103 = por %p101, %p102
      %p104 = scmp.ne.s32.totalorder %s92, %s93
      %p105 = scmp.eq.s32.totalorder %s20, 1
      %p106 = por %p104, %p105
      %p108 = scmp.ne.s32.totalorder %s93, %s107
      %p109 = scmp.eq.s32.totalorder %s20, 0
      %p110 = por %p108, %p109
      %s112 = sadd.s32 %s111, 1
      %p115 = scmp.eq.s32.totalorder %s14, 1
      %p116 = scmp.ne.s32.totalorder %s111, %s113
      %p117 = scmp.eq.s32.totalorder %s14, 0
      %p118 = por %p116, %p117
      %p119 = scmp.ne.s32.totalorder %s111, %s113
      %p120 = scmp.eq.s32.totalorder %s19, 1
      %p121 = por %p119, %p120
      %p122 = scmp.ne.s32.totalorder %s113, %s114
      %p123 = scmp.eq.s32.totalorder %s19, 0
      %p124 = por %p122, %p123
      %p125 = scmp.ne.s32.totalorder %s113, %s114
      %p126 = scmp.eq.s32.totalorder %s20, 1
      %p127 = por %p125, %p126
      %p129 = scmp.ne.s32.totalorder %s114, %s128
      %p130 = scmp.eq.s32.totalorder %s20, 0
      %p131 = por %p129, %p130
      %s132 = ssub.s32 %s14, %s21
      %p133 = scmp.eq.s32.totalorder %s132, 0
      %s135 = sadd.s32 %s134, 1
      %s136 = scalar_select %p133, %s134, %s135
      %p139 = pneg %p133
      %p140 = scmp.eq.s32.totalorder %s14, 1
      %p141 = por %p139, %p140
      %p142 = scmp.ne.s32.totalorder %s134, %s137
      %p143 = scmp.eq.s32.totalorder %s14, 0
      %p144 = por %p142, %p143
      %p145 = scmp.ne.s32.totalorder %s134, %s137
      %p146 = scmp.eq.s32.totalorder %s19, 1
      %p147 = por %p145, %p146
      %p148 = scmp.ne.s32.totalorder %s137, %s138
      %p149 = scmp.eq.s32.totalorder %s19, 0
      %p150 = por %p148, %p149
      %p151 = scmp.ne.s32.totalorder %s137, %s138
      %p152 = scmp.eq.s32.totalorder %s20, 1
      %p153 = por %p151, %p152
      %p155 = scmp.ne.s32.totalorder %s138, %s154
      %p156 = scmp.eq.s32.totalorder %s20, 0
      %p157 = por %p155, %p156
      %p158 = scmp.le.s32.totalorder 1, %s14
      %p159 = scmp.lt.s32.totalorder %s14, 3
      %p160 = pnand %p158, %p159
      %p161 = pneg %p160
      // Predicated region
      $region9: #{encoder_cnn_forward.1} parent=5 // pred_check
        _
      $region10: #{encoder_cnn_forward.1} parent=5 // pred_check_branch
        %163 = sbr.rel (%p160) target = $region12
      $region11: #{encoder_cnn_forward.1} parent=5 // pred_region
        %s164 = ssub.s32 %s14, 1
        // Predicated region
        $region13: #{encoder_cnn_forward.1} parent=11 // pred_check
          %p165 = pneg %p61
        $region14: #{encoder_cnn_forward.1} parent=11 // pred_check_branch
          %167 = sbr.rel (%p165) target = $region16
        $region15: #{encoder_cnn_forward.1} parent=11 // pred_region
          _
        $region16: #{encoder_cnn_forward.1} parent=11 // pred_fallthru
          _
        // Predicated region
        $region17: #{encoder_cnn_forward.1} parent=11 // pred_check
          %p168 = pneg %p82
        $region18: #{encoder_cnn_forward.1} parent=11 // pred_check_branch
          %170 = sbr.rel (%p168) target = $region20
        $region19: #{encoder_cnn_forward.1} parent=11 // pred_region
          _
        $region20: #{encoder_cnn_forward.1} parent=11 // pred_fallthru
          _
        // Predicated region
        $region21: #{encoder_cnn_forward.1} parent=11 // pred_check
          %p171 = pneg %p103
        $region22: #{encoder_cnn_forward.1} parent=11 // pred_check_branch
          %173 = sbr.rel (%p171) target = $region24
        $region23: #{encoder_cnn_forward.1} parent=11 // pred_region
          _
        $region24: #{encoder_cnn_forward.1} parent=11 // pred_fallthru
          _
        // Predicated region
        $region25: #{encoder_cnn_forward.1} parent=11 // pred_check
          %p174 = pneg %p124
        $region26: #{encoder_cnn_forward.1} parent=11 // pred_check_branch
          %176 = sbr.rel (%p174) target = $region28
        $region27: #{encoder_cnn_forward.1} parent=11 // pred_region
          _
        $region28: #{encoder_cnn_forward.1} parent=11 // pred_fallthru
          _
      $region12: #{encoder_cnn_forward.1} parent=5 // pred_fallthru
        _
      %p177 = scmp.lt.s32.totalorder %s14, 2
      // Predicated region
      $region29: #{encoder_cnn_forward.1} parent=5 // pred_check
        %p178 = pneg %p177
      $region30: #{encoder_cnn_forward.1} parent=5 // pred_check_branch
        %180 = sbr.rel (%p178) target = $region32
      $region31: #{encoder_cnn_forward.1} parent=5 // pred_region
        // Predicated region
        $region33: #{encoder_cnn_forward.1} parent=31 // pred_check
          %p181 = pneg %p34
        $region34: #{encoder_cnn_forward.1} parent=31 // pred_check_branch
          %183 = sbr.rel (%p181) target = $region36
        $region35: #{encoder_cnn_forward.1} parent=31 // pred_region
          %s184 = smul.u32 2, %s14
          %p185 = scmp.lt.s32.totalorder %s184, 3
          %s186 = scalar_select %p185, %s184, 3
          %s187 = smul.addr %s186, 64
          %s188 = smul.addr %s187, 4
          %s189 = scalar_lea.vmem %s0, %s188
          %s190 = smul.u32 2, %s14
        $region36: #{encoder_cnn_forward.1} parent=31 // pred_fallthru
          _
      $region32: #{encoder_cnn_forward.1} parent=5 // pred_fallthru
        _
      %p191 = scmp.le.s32.totalorder 1, %s14
      %p192 = scmp.lt.s32.totalorder %s14, 3
      %p193 = pnand %p191, %p192
      %p194 = pneg %p193
      // Predicated region
      $region37: #{encoder_cnn_forward.1} parent=5 // pred_check
        _
      $region38: #{encoder_cnn_forward.1} parent=5 // pred_check_branch
        %196 = sbr.rel (%p193) target = $region40
      $region39: #{encoder_cnn_forward.1} parent=5 // pred_region
        %s197 = ssub.s32 %s14, 1
        %s198 = smul.u32 2, %s19
        %p199 = scmp.lt.s32.totalorder %s198, 3
        %s200 = scalar_select %p199, %s198, 3
        %s201 = smul.addr %s200, 64
        %s202 = smul.addr %s201, 4
        %s203 = scalar_lea.vmem %s0, %s202
        %p204 = pneg %p40
        %p205 = pneg %p37
        %p206 = pneg %p61
        %p207 = pneg %p58
        %p208 = pneg %p82
        %p209 = pneg %p79
        %p210 = pneg %p103
        %p211 = pneg %p100
        %p212 = pneg %p124
        %p213 = pneg %p121
        %p214 = pneg %p150
        %p215 = pneg %p147
        %s216 = sand.u32 %s137, 1
        %s217 = scalar_lea.sflag [#allocation3], %s216
        %s218 = sand.u32 %s137, 1
        %s219 = smul.addr %s218, 12
        %s220 = scalar_lea.vmem [#allocation2], %s219
        %s221 = smul.u32 2, %s19
        %p222 = scmp.lt.s32.totalorder %s221, 3
        %s223 = scalar_select %p222, %s221, 3
        %s224 = smul.addr %s223, 64
        %s225 = smul.addr %s224, 4
        %s226 = scalar_lea.vmem %s0, %s225
        %s227 = smul.u32 2, %s19
        %s228 = smul.u32 2, %s19
        %v230 = vld [vmem:[%s226] sm:$0xf]
        %v231 = vld [vmem:[%s226 + $0x4] sm:$0xf]
        %v232 = vld [vmem:[%s226 + $0x8] sm:$0xf]
        %v233 = vld [vmem:[%s226 + $0xc] sm:$0xf]
        %v234 = vld [vmem:[%s226 + $0x10] sm:$0xf]
        %v235 = vld [vmem:[%s226 + $0x14] sm:$0xf]
        %v236 = vld [vmem:[%s226 + $0x18] sm:$0xf]
        %v237 = vld [vmem:[%s226 + $0x1c] sm:$0xf]
        %v238 = vld [vmem:[%s226 + $0x20] sm:$0xf]
        %v239 = vld [vmem:[%s226 + $0x24] sm:$0xf]
        %v240 = vld [vmem:[%s226 + $0x28] sm:$0xf]
        %v241 = vld [vmem:[%s226 + $0x2c] sm:$0xf]
        %v242 = vld [vmem:[%s226 + $0x30] sm:$0xf]
        %v243 = vld [vmem:[%s226 + $0x34] sm:$0xf]
        %v244 = vld [vmem:[%s226 + $0x38] sm:$0xf]
        %v245 = vld [vmem:[%s226 + $0x3c] sm:$0xf]
        %v246 = vld [vmem:[%s226 + $0x40] sm:$0xf]
        %v247 = vld [vmem:[%s226 + $0x44] sm:$0xf]
        %v248 = vld [vmem:[%s226 + $0x48] sm:$0xf]
        %v249 = vld [vmem:[%s226 + $0x4c] sm:$0xf]
        %v250 = vld [vmem:[%s226 + $0x50] sm:$0xf]
        %v251 = vld [vmem:[%s226 + $0x54] sm:$0xf]
        %v252 = vld [vmem:[%s226 + $0x58] sm:$0xf]
        %v253 = vld [vmem:[%s226 + $0x5c] sm:$0xf]
        %v254 = vld [vmem:[%s226 + $0x60] sm:$0xf]
        %v255 = vld [vmem:[%s226 + $0x64] sm:$0xf]
        %v256 = vld [vmem:[%s226 + $0x68] sm:$0xf]
        %v257 = vld [vmem:[%s226 + $0x6c] sm:$0xf]
        %v258 = vld [vmem:[%s226 + $0x70] sm:$0xf]
        %v259 = vld [vmem:[%s226 + $0x74] sm:$0xf]
        %v260 = vld [vmem:[%s226 + $0x78] sm:$0xf]
        %v261 = vld [vmem:[%s226 + $0x7c] sm:$0xf]
        %v262 = vld [vmem:[%s226 + $0x80] sm:$0xf]
        %v263 = vld [vmem:[%s226 + $0x84] sm:$0xf]
        %v264 = vld [vmem:[%s226 + $0x88] sm:$0xf]
        %v265 = vld [vmem:[%s226 + $0x8c] sm:$0xf]
        %v266 = vld [vmem:[%s226 + $0x90] sm:$0xf]
        %v267 = vld [vmem:[%s226 + $0x94] sm:$0xf]
        %v268 = vld [vmem:[%s226 + $0x98] sm:$0xf]
        %v269 = vld [vmem:[%s226 + $0x9c] sm:$0xf]
        %v270 = vld [vmem:[%s226 + $0xa0] sm:$0xf]
        %v271 = vld [vmem:[%s226 + $0xa4] sm:$0xf]
        %v272 = vld [vmem:[%s226 + $0xa8] sm:$0xf]
        %v273 = vld [vmem:[%s226 + $0xac] sm:$0xf]
        %v274 = vld [vmem:[%s226 + $0xb0] sm:$0xf]
        %v275 = vld [vmem:[%s226 + $0xb4] sm:$0xf]
        %v276 = vld [vmem:[%s226 + $0xb8] sm:$0xf]
        %v277 = vld [vmem:[%s226 + $0xbc] sm:$0xf]
        %v278 = vld [vmem:[%s226 + $0xc0] sm:$0xf]
        %v279 = vld [vmem:[%s226 + $0xc4] sm:$0xf]
        %v280 = vld [vmem:[%s226 + $0xc8] sm:$0xf]
        %v281 = vld [vmem:[%s226 + $0xcc] sm:$0xf]
        %v282 = vld [vmem:[%s226 + $0xd0] sm:$0xf]
        %v283 = vld [vmem:[%s226 + $0xd4] sm:$0xf]
        %v284 = vld [vmem:[%s226 + $0xd8] sm:$0xf]
        %v285 = vld [vmem:[%s226 + $0xdc] sm:$0xf]
        %v286 = vld [vmem:[%s226 + $0xe0] sm:$0xf]
        %v287 = vld [vmem:[%s226 + $0xe4] sm:$0xf]
        %v288 = vld [vmem:[%s226 + $0xe8] sm:$0xf]
        %v289 = vld [vmem:[%s226 + $0xec] sm:$0xf]
        %v290 = vld [vmem:[%s226 + $0xf0] sm:$0xf]
        %v291 = vld [vmem:[%s226 + $0xf4] sm:$0xf]
        %v292 = vld [vmem:[%s226 + $0xf8] sm:$0xf]
        %v293 = vld [vmem:[%s226 + $0xfc] sm:$0xf]
        %v294 = vld [vmem:[%s226 + $0x100] sm:$0xf]
        %v295 = vld [vmem:[%s226 + $0x104] sm:$0xf]
        %v296 = vld [vmem:[%s226 + $0x108] sm:$0xf]
        %v297 = vld [vmem:[%s226 + $0x10c] sm:$0xf]
        %v298 = vld [vmem:[%s226 + $0x110] sm:$0xf]
        %v299 = vld [vmem:[%s226 + $0x114] sm:$0xf]
        %v300 = vld [vmem:[%s226 + $0x118] sm:$0xf]
        %v301 = vld [vmem:[%s226 + $0x11c] sm:$0xf]
        %v302 = vld [vmem:[%s226 + $0x120] sm:$0xf]
        %v303 = vld [vmem:[%s226 + $0x124] sm:$0xf]
        %v304 = vld [vmem:[%s226 + $0x128] sm:$0xf]
        %v305 = vld [vmem:[%s226 + $0x12c] sm:$0xf]
        %v306 = vld [vmem:[%s226 + $0x130] sm:$0xf]
        %v307 = vld [vmem:[%s226 + $0x134] sm:$0xf]
        %v308 = vld [vmem:[%s226 + $0x138] sm:$0xf]
        %v309 = vld [vmem:[%s226 + $0x13c] sm:$0xf]
        %v310 = vld [vmem:[%s226 + $0x140] sm:$0xf]
        %v311 = vld [vmem:[%s226 + $0x144] sm:$0xf]
        %v312 = vld [vmem:[%s226 + $0x148] sm:$0xf]
        %v313 = vld [vmem:[%s226 + $0x14c] sm:$0xf]
        %v314 = vld [vmem:[%s226 + $0x150] sm:$0xf]
        %v315 = vld [vmem:[%s226 + $0x154] sm:$0xf]
        %v316 = vld [vmem:[%s226 + $0x158] sm:$0xf]
        %v317 = vld [vmem:[%s226 + $0x15c] sm:$0xf]
        %v318 = vld [vmem:[%s226 + $0x160] sm:$0xf]
        %v319 = vld [vmem:[%s226 + $0x164] sm:$0xf]
        %v320 = vld [vmem:[%s226 + $0x168] sm:$0xf]
        %v321 = vld [vmem:[%s226 + $0x16c] sm:$0xf]
        %v322 = vld [vmem:[%s226 + $0x170] sm:$0xf]
        %v323 = vld [vmem:[%s226 + $0x174] sm:$0xf]
        %v324 = vld [vmem:[%s226 + $0x178] sm:$0xf]
        %v325 = vld [vmem:[%s226 + $0x17c] sm:$0xf]
        %v326 = vld [vmem:[%s226 + $0x180] sm:$0xf]
        %v327 = vld [vmem:[%s226 + $0x184] sm:$0xf]
        %v328 = vld [vmem:[%s226 + $0x188] sm:$0xf]
        %v329 = vld [vmem:[%s226 + $0x18c] sm:$0xf]
        %v330 = vld [vmem:[%s226 + $0x190] sm:$0xf]
        %v331 = vld [vmem:[%s226 + $0x194] sm:$0xf]
        %v332 = vld [vmem:[%s226 + $0x198] sm:$0xf]
        %v333 = vld [vmem:[%s226 + $0x19c] sm:$0xf]
        %v334 = vld [vmem:[%s226 + $0x1a0] sm:$0xf]
        %v335 = vld [vmem:[%s226 + $0x1a4] sm:$0xf]
        %v336 = vld [vmem:[%s226 + $0x1a8] sm:$0xf]
        %v337 = vld [vmem:[%s226 + $0x1ac] sm:$0xf]
        %v338 = vld [vmem:[%s226 + $0x1b0] sm:$0xf]
        %v339 = vld [vmem:[%s226 + $0x1b4] sm:$0xf]
        %v340 = vld [vmem:[%s226 + $0x1b8] sm:$0xf]
        %v341 = vld [vmem:[%s226 + $0x1bc] sm:$0xf]
        %v342 = vld [vmem:[%s226 + $0x1c0] sm:$0xf]
        %v343 = vld [vmem:[%s226 + $0x1c4] sm:$0xf]
        %v344 = vld [vmem:[%s226 + $0x1c8] sm:$0xf]
        %v345 = vld [vmem:[%s226 + $0x1cc] sm:$0xf]
        %v346 = vld [vmem:[%s226 + $0x1d0] sm:$0xf]
        %v347 = vld [vmem:[%s226 + $0x1d4] sm:$0xf]
        %v348 = vld [vmem:[%s226 + $0x1d8] sm:$0xf]
        %v349 = vld [vmem:[%s226 + $0x1dc] sm:$0xf]
        %v350 = vld [vmem:[%s226 + $0x1e0] sm:$0xf]
        %v351 = vld [vmem:[%s226 + $0x1e4] sm:$0xf]
        %v352 = vld [vmem:[%s226 + $0x1e8] sm:$0xf]
        %v353 = vld [vmem:[%s226 + $0x1ec] sm:$0xf]
        %v354 = vld [vmem:[%s226 + $0x1f0] sm:$0xf]
        %v355 = vld [vmem:[%s226 + $0x1f4] sm:$0xf]
        %v356 = vld [vmem:[%s226 + $0x1f8] sm:$0xf]
        %v357 = vld [vmem:[%s226 + $0x1fc] sm:$0xf]
        %v358 = vld [vmem:[%s1] sm:$0xf]
        %v359 = vld [vmem:[%s1 + $0x4] sm:$0xf]
        %v360 = vld [vmem:[%s1 + $0x8] sm:$0xf]
        %v361 = vld [vmem:[%s1 + $0xc] sm:$0xf]
        %v362 = vld [vmem:[%s2] sm:$0x1]
        %v364 = vlaneseq
        %v365 = vshrl.u32 %v364, 7
        %v366 = vsub.s32 0, %v365
        %v367 = vrot.slane %v362, %v366
        %v497 = vunpack.c.l.b16 %v230
        %v498 = vunpack.c.l.b16 %v231
        %v499 = vunpack.c.l.b16 %v232
        %v500 = vunpack.c.l.b16 %v233
        %v501 = vunpack.c.l.b16 %v234
        %v502 = vunpack.c.l.b16 %v235
        %v503 = vunpack.c.l.b16 %v236
        %v504 = vunpack.c.l.b16 %v237
        %v505 = vunpack.c.l.b16 %v238
        %v506 = vunpack.c.l.b16 %v239
        %v507 = vunpack.c.l.b16 %v240
        %v508 = vunpack.c.l.b16 %v241
        %v509 = vunpack.c.l.b16 %v242
        %v510 = vunpack.c.l.b16 %v243
        %v511 = vunpack.c.l.b16 %v244
        %v512 = vunpack.c.l.b16 %v245
        %v513 = vunpack.c.l.b16 %v246
        %v514 = vunpack.c.l.b16 %v247
        %v515 = vunpack.c.l.b16 %v248
        %v516 = vunpack.c.l.b16 %v249
        %v517 = vunpack.c.l.b16 %v250
        %v518 = vunpack.c.l.b16 %v251
        %v519 = vunpack.c.l.b16 %v252
        %v520 = vunpack.c.l.b16 %v253
        %v521 = vunpack.c.l.b16 %v254
        %v522 = vunpack.c.l.b16 %v255
        %v523 = vunpack.c.l.b16 %v256
        %v524 = vunpack.c.l.b16 %v257
        %v525 = vunpack.c.l.b16 %v258
        %v526 = vunpack.c.l.b16 %v259
        %v527 = vunpack.c.l.b16 %v260
        %v528 = vunpack.c.l.b16 %v261
        %v529 = vunpack.c.l.b16 %v262
        %v530 = vunpack.c.l.b16 %v263
        %v531 = vunpack.c.l.b16 %v264
        %v532 = vunpack.c.l.b16 %v265
        %v533 = vunpack.c.l.b16 %v266
        %v534 = vunpack.c.l.b16 %v267
        %v535 = vunpack.c.l.b16 %v268
        %v536 = vunpack.c.l.b16 %v269
        %v537 = vunpack.c.l.b16 %v270
        %v538 = vunpack.c.l.b16 %v271
        %v539 = vunpack.c.l.b16 %v272
        %v540 = vunpack.c.l.b16 %v273
        %v541 = vunpack.c.l.b16 %v274
        %v542 = vunpack.c.l.b16 %v275
        %v543 = vunpack.c.l.b16 %v276
        %v544 = vunpack.c.l.b16 %v277
        %v545 = vunpack.c.l.b16 %v278
        %v546 = vunpack.c.l.b16 %v279
        %v547 = vunpack.c.l.b16 %v280
        %v548 = vunpack.c.l.b16 %v281
        %v549 = vunpack.c.l.b16 %v282
        %v550 = vunpack.c.l.b16 %v283
        %v551 = vunpack.c.l.b16 %v284
        %v552 = vunpack.c.l.b16 %v285
        %v553 = vunpack.c.l.b16 %v286
        %v554 = vunpack.c.l.b16 %v287
        %v555 = vunpack.c.l.b16 %v288
        %v556 = vunpack.c.l.b16 %v289
        %v557 = vunpack.c.l.b16 %v290
        %v558 = vunpack.c.l.b16 %v291
        %v559 = vunpack.c.l.b16 %v292
        %v560 = vunpack.c.l.b16 %v293
        %v561 = vunpack.c.l.b16 %v294
        %v562 = vunpack.c.l.b16 %v295
        %v563 = vunpack.c.l.b16 %v296
        %v564 = vunpack.c.l.b16 %v297
        %v565 = vunpack.c.l.b16 %v298
        %v566 = vunpack.c.l.b16 %v299
        %v567 = vunpack.c.l.b16 %v300
        %v568 = vunpack.c.l.b16 %v301
        %v569 = vunpack.c.l.b16 %v302
        %v570 = vunpack.c.l.b16 %v303
        %v571 = vunpack.c.l.b16 %v304
        %v572 = vunpack.c.l.b16 %v305
        %v573 = vunpack.c.l.b16 %v306
        %v574 = vunpack.c.l.b16 %v307
        %v575 = vunpack.c.l.b16 %v308
        %v576 = vunpack.c.l.b16 %v309
        %v577 = vunpack.c.l.b16 %v310
        %v578 = vunpack.c.l.b16 %v311
        %v579 = vunpack.c.l.b16 %v312
        %v580 = vunpack.c.l.b16 %v313
        %v581 = vunpack.c.l.b16 %v314
        %v582 = vunpack.c.l.b16 %v315
        %v583 = vunpack.c.l.b16 %v316
        %v584 = vunpack.c.l.b16 %v317
        %v585 = vunpack.c.l.b16 %v318
        %v586 = vunpack.c.l.b16 %v319
        %v587 = vunpack.c.l.b16 %v320
        %v588 = vunpack.c.l.b16 %v321
        %v589 = vunpack.c.l.b16 %v322
        %v590 = vunpack.c.l.b16 %v323
        %v591 = vunpack.c.l.b16 %v324
        %v592 = vunpack.c.l.b16 %v325
        %v593 = vunpack.c.l.b16 %v326
        %v594 = vunpack.c.l.b16 %v327
        %v595 = vunpack.c.l.b16 %v328
        %v596 = vunpack.c.l.b16 %v329
        %v597 = vunpack.c.l.b16 %v330
        %v598 = vunpack.c.l.b16 %v331
        %v599 = vunpack.c.l.b16 %v332
        %v600 = vunpack.c.l.b16 %v333
        %v601 = vunpack.c.l.b16 %v334
        %v602 = vunpack.c.l.b16 %v335
        %v603 = vunpack.c.l.b16 %v336
        %v604 = vunpack.c.l.b16 %v337
        %v605 = vunpack.c.l.b16 %v338
        %v606 = vunpack.c.l.b16 %v339
        %v607 = vunpack.c.l.b16 %v340
        %v608 = vunpack.c.l.b16 %v341
        %v609 = vunpack.c.l.b16 %v342
        %v610 = vunpack.c.l.b16 %v343
        %v611 = vunpack.c.l.b16 %v344
        %v612 = vunpack.c.l.b16 %v345
        %v613 = vunpack.c.l.b16 %v346
        %v614 = vunpack.c.l.b16 %v347
        %v615 = vunpack.c.l.b16 %v348
        %v616 = vunpack.c.l.b16 %v349
        %v617 = vunpack.c.l.b16 %v350
        %v618 = vunpack.c.l.b16 %v351
        %v619 = vunpack.c.l.b16 %v352
        %v620 = vunpack.c.l.b16 %v353
        %v621 = vunpack.c.l.b16 %v354
        %v622 = vunpack.c.l.b16 %v355
        %v623 = vunpack.c.l.b16 %v356
        %v624 = vunpack.c.l.b16 %v357
        %v625 = vpack.c.b16 %v498, %v497
        %v626 = vpack.c.b16 %v500, %v499
        %v627 = vpack.c.b16 %v502, %v501
        %v628 = vpack.c.b16 %v504, %v503
        %v629 = vpack.c.b16 %v506, %v505
        %v630 = vpack.c.b16 %v508, %v507
        %v631 = vpack.c.b16 %v510, %v509
        %v632 = vpack.c.b16 %v512, %v511
        %v633 = vpack.c.b16 %v514, %v513
        %v634 = vpack.c.b16 %v516, %v515
        %v635 = vpack.c.b16 %v518, %v517
        %v636 = vpack.c.b16 %v520, %v519
        %v637 = vpack.c.b16 %v522, %v521
        %v638 = vpack.c.b16 %v524, %v523
        %v639 = vpack.c.b16 %v526, %v525
        %v640 = vpack.c.b16 %v528, %v527
        %v641 = vpack.c.b16 %v530, %v529
        %v642 = vpack.c.b16 %v532, %v531
        %v643 = vpack.c.b16 %v534, %v533
        %v644 = vpack.c.b16 %v536, %v535
        %v645 = vpack.c.b16 %v538, %v537
        %v646 = vpack.c.b16 %v540, %v539
        %v647 = vpack.c.b16 %v542, %v541
        %v648 = vpack.c.b16 %v544, %v543
        %v649 = vpack.c.b16 %v546, %v545
        %v650 = vpack.c.b16 %v548, %v547
        %v651 = vpack.c.b16 %v550, %v549
        %v652 = vpack.c.b16 %v552, %v551
        %v653 = vpack.c.b16 %v554, %v553
        %v654 = vpack.c.b16 %v556, %v555
        %v655 = vpack.c.b16 %v558, %v557
        %v656 = vpack.c.b16 %v560, %v559
        %v657 = vpack.c.b16 %v562, %v561
        %v658 = vpack.c.b16 %v564, %v563
        %v659 = vpack.c.b16 %v566, %v565
        %v660 = vpack.c.b16 %v568, %v567
        %v661 = vpack.c.b16 %v570, %v569
        %v662 = vpack.c.b16 %v572, %v571
        %v663 = vpack.c.b16 %v574, %v573
        %v664 = vpack.c.b16 %v576, %v575
        %v665 = vpack.c.b16 %v578, %v577
        %v666 = vpack.c.b16 %v580, %v579
        %v667 = vpack.c.b16 %v582, %v581
        %v668 = vpack.c.b16 %v584, %v583
        %v669 = vpack.c.b16 %v586, %v585
        %v670 = vpack.c.b16 %v588, %v587
        %v671 = vpack.c.b16 %v590, %v589
        %v672 = vpack.c.b16 %v592, %v591
        %v673 = vpack.c.b16 %v594, %v593
        %v674 = vpack.c.b16 %v596, %v595
        %v675 = vpack.c.b16 %v598, %v597
        %v676 = vpack.c.b16 %v600, %v599
        %v677 = vpack.c.b16 %v602, %v601
        %v678 = vpack.c.b16 %v604, %v603
        %v679 = vpack.c.b16 %v606, %v605
        %v680 = vpack.c.b16 %v608, %v607
        %v681 = vpack.c.b16 %v610, %v609
        %v682 = vpack.c.b16 %v612, %v611
        %v683 = vpack.c.b16 %v614, %v613
        %v684 = vpack.c.b16 %v616, %v615
        %v685 = vpack.c.b16 %v618, %v617
        %v686 = vpack.c.b16 %v620, %v619
        %v687 = vpack.c.b16 %v622, %v621
        %v688 = vpack.c.b16 %v624, %v623
        %v693 = vunpack.c.l.b16 %v358
        %v694 = vunpack.c.l.b16 %v359
        %v695 = vunpack.c.l.b16 %v360
        %v696 = vunpack.c.l.b16 %v361
        %v697 = vpack.c.b16 %v694, %v693
        %v698 = vpack.c.b16 %v696, %v695
        %vm701 = vcmask 261120
        %v703 = vsel %vm701, %v625, 0
        %v706 = vsel %vm701, %v626, 0
        %v709 = vsel %vm701, %v627, 0
        %v712 = vsel %vm701, %v628, 0
        %v715 = vsel %vm701, %v629, 0
        %v718 = vsel %vm701, %v630, 0
        %v721 = vsel %vm701, %v631, 0
        %v724 = vsel %vm701, %v632, 0
        %v727 = vsel %vm701, %v633, 0
        %v730 = vsel %vm701, %v634, 0
        %v733 = vsel %vm701, %v635, 0
        %v736 = vsel %vm701, %v636, 0
        %v739 = vsel %vm701, %v637, 0
        %v742 = vsel %vm701, %v638, 0
        %v745 = vsel %vm701, %v639, 0
        %v748 = vsel %vm701, %v640, 0
        %v751 = vsel %vm701, %v641, 0
        %v754 = vsel %vm701, %v642, 0
        %v757 = vsel %vm701, %v643, 0
        %v760 = vsel %vm701, %v644, 0
        %v763 = vsel %vm701, %v645, 0
        %v766 = vsel %vm701, %v646, 0
        %v769 = vsel %vm701, %v647, 0
        %v772 = vsel %vm701, %v648, 0
        %v775 = vsel %vm701, %v649, 0
        %v778 = vsel %vm701, %v650, 0
        %v781 = vsel %vm701, %v651, 0
        %v784 = vsel %vm701, %v652, 0
        %v787 = vsel %vm701, %v653, 0
        %v790 = vsel %vm701, %v654, 0
        %v793 = vsel %vm701, %v655, 0
        %v796 = vsel %vm701, %v656, 0
        %v799 = vsel %vm701, %v657, 0
        %v802 = vsel %vm701, %v658, 0
        %v805 = vsel %vm701, %v659, 0
        %v808 = vsel %vm701, %v660, 0
        %v811 = vsel %vm701, %v661, 0
        %v814 = vsel %vm701, %v662, 0
        %v817 = vsel %vm701, %v663, 0
        %v820 = vsel %vm701, %v664, 0
        %v823 = vsel %vm701, %v665, 0
        %v826 = vsel %vm701, %v666, 0
        %v829 = vsel %vm701, %v667, 0
        %v832 = vsel %vm701, %v668, 0
        %v835 = vsel %vm701, %v669, 0
        %v838 = vsel %vm701, %v670, 0
        %v841 = vsel %vm701, %v671, 0
        %v844 = vsel %vm701, %v672, 0
        %v847 = vsel %vm701, %v673, 0
        %v850 = vsel %vm701, %v674, 0
        %v853 = vsel %vm701, %v675, 0
        %v856 = vsel %vm701, %v676, 0
        %v859 = vsel %vm701, %v677, 0
        %v862 = vsel %vm701, %v678, 0
        %v865 = vsel %vm701, %v679, 0
        %v868 = vsel %vm701, %v680, 0
        %v871 = vsel %vm701, %v681, 0
        %v874 = vsel %vm701, %v682, 0
        %v877 = vsel %vm701, %v683, 0
        %v880 = vsel %vm701, %v684, 0
        %v883 = vsel %vm701, %v685, 0
        %v886 = vsel %vm701, %v686, 0
        %v889 = vsel %vm701, %v687, 0
        %v892 = vsel %vm701, %v688, 0
        %894 = vmatprep.subr.bf16.mxu0 0
        %895 = vmatpush1.bf16.msra.mxu0 %v697
        %896 = vmatprep.subr.bf16.mxu0 0
        %897 = vmatpush1.bf16.msra.mxu0 %v698
        %898 = vmatprep.subr.bf16.mxu0 0
        %899 = vmatpush1.bf16.msra.mxu0 0
        %900 = vmatprep.subr.bf16.mxu0 0
        %901 = vmatpush1.bf16.msra.mxu0 0
        %902 = vmatprep.subr.bf16.mxu0 0
        %903 = vmatpush1.bf16.msra.mxu0 0
        %904 = vmatprep.subr.bf16.mxu0 0
        %905 = vmatpush1.bf16.msra.mxu0 0
        %906 = vmatprep.subr.bf16.mxu0 0
        %907 = vmatpush1.bf16.msra.mxu0 0
        %908 = vmatprep.subr.bf16.mxu0 0
        %909 = vmatpush1.bf16.msra.mxu0 0
        %910 = vmatprep.subr.bf16.mxu0 0
        %911 = vmatpush1.bf16.msra.mxu0 0
        %912 = vmatprep.subr.bf16.mxu0 0
        %913 = vmatpush1.bf16.msra.mxu0 0
        %914 = vmatprep.subr.bf16.mxu0 0
        %915 = vmatpush1.bf16.msra.mxu0 0
        %916 = vmatprep.subr.bf16.mxu0 0
        %917 = vmatpush1.bf16.msra.mxu0 0
        %918 = vmatprep.subr.bf16.mxu0 0
        %919 = vmatpush1.bf16.msra.mxu0 0
        %920 = vmatprep.subr.bf16.mxu0 0
        %921 = vmatpush1.bf16.msra.mxu0 0
        %922 = vmatprep.subr.bf16.mxu0 0
        %923 = vmatpush1.bf16.msra.mxu0 0
        %924 = vmatprep.subr.bf16.mxu0 0
        %925 = vmatpush1.bf16.msra.mxu0 0
        %926 = vmatprep.mubr.bf16.mxu0 0
        %927 = vmatmul.mubr.bf16.gmra.mrb[0].mxu0 %v703
        %v928 = vpop.f32.mrb[0].mxu0
        %v929 = vadd.f32 %v367, %v928
        %v930 = vpop.f32.mrb[0].mxu0
        %v931 = vpop.f32.mrb[0].mxu0
        %v932 = vadd.f32 %v367, %v931
        %v933 = vpop.f32.mrb[0].mxu0
        %934 = vmatprep.mubr.bf16.mxu0 0
        %935 = vmatmul.mubr.bf16.gmra.mrb[0].mxu0 %v706
        %v936 = vpop.f32.mrb[0].mxu0
        %v937 = vadd.f32 %v367, %v936
        %v938 = vpop.f32.mrb[0].mxu0
        %v939 = vpop.f32.mrb[0].mxu0
        %v940 = vadd.f32 %v367, %v939
        %v941 = vpop.f32.mrb[0].mxu0
        %942 = vmatprep.mubr.bf16.mxu0 0
        %943 = vmatmul.mubr.bf16.gmra.mrb[0].mxu0 %v709
        %v944 = vpop.f32.mrb[0].mxu0
        %v945 = vadd.f32 %v367, %v944
        %v946 = vpop.f32.mrb[0].mxu0
        %v947 = vpop.f32.mrb[0].mxu0
        %v948 = vadd.f32 %v367, %v947
        %v949 = vpop.f32.mrb[0].mxu0
        %950 = vmatprep.mubr.bf16.mxu0 0
        %951 = vmatmul.mubr.bf16.gmra.mrb[0].mxu0 %v712
        %v952 = vpop.f32.mrb[0].mxu0
        %v953 = vadd.f32 %v367, %v952
        %v954 = vpop.f32.mrb[0].mxu0
        %v955 = vpop.f32.mrb[0].mxu0
        %v956 = vadd.f32 %v367, %v955
        %v957 = vpop.f32.mrb[0].mxu0
        %958 = vmatprep.mubr.bf16.mxu0 0
        %959 = vmatmul.mubr.bf16.gmra.mrb[0].mxu0 %v715
        %v960 = vpop.f32.mrb[0].mxu0
        %v961 = vadd.f32 %v367, %v960
        %v962 = vpop.f32.mrb[0].mxu0
        %v963 = vpop.f32.mrb[0].mxu0
        %v964 = vadd.f32 %v367, %v963
        %v965 = vpop.f32.mrb[0].mxu0
        %966 = vmatprep.mubr.bf16.mxu0 0
        %967 = vmatmul.mubr.bf16.gmra.mrb[0].mxu0 %v718
        %v968 = vpop.f32.mrb[0].mxu0
        %v969 = vadd.f32 %v367, %v968
        %v970 = vpop.f32.mrb[0].mxu0
        %v971 = vpop.f32.mrb[0].mxu0
        %v972 = vadd.f32 %v367, %v971
        %v973 = vpop.f32.mrb[0].mxu0
        %974 = vmatprep.mubr.bf16.mxu0 0
        %975 = vmatmul.mubr.bf16.gmra.mrb[0].mxu0 %v721
        %v976 = vpop.f32.mrb[0].mxu0
        %v977 = vadd.f32 %v367, %v976
        %v978 = vpop.f32.mrb[0].mxu0
        %v979 = vpop.f32.mrb[0].mxu0
        %v980 = vadd.f32 %v367, %v979
        %v981 = vpop.f32.mrb[0].mxu0
        %982 = vmatprep.mubr.bf16.mxu0 0
        %983 = vmatmul.mubr.bf16.gmra.mrb[0].mxu0 %v724
        %v984 = vpop.f32.mrb[0].mxu0
        %v985 = vadd.f32 %v367, %v984
        %v986 = vpop.f32.mrb[0].mxu0
        %v987 = vpop.f32.mrb[0].mxu0
        %v988 = vadd.f32 %v367, %v987
        %v989 = vpop.f32.mrb[0].mxu0
        %990 = vmatprep.mubr.bf16.mxu0 0
        %991 = vmatmul.mubr.bf16.gmra.mrb[0].mxu0 %v727
        %v992 = vpop.f32.mrb[0].mxu0
        %v993 = vadd.f32 %v367, %v992
        %v994 = vpop.f32.mrb[0].mxu0
        %v995 = vpop.f32.mrb[0].mxu0
        %v996 = vadd.f32 %v367, %v995
        %v997 = vpop.f32.mrb[0].mxu0
        %998 = vmatprep.mubr.bf16.mxu0 0
        %999 = vmatmul.mubr.bf16.gmra.mrb[0].mxu0 %v730
        %v1000 = vpop.f32.mrb[0].mxu0
        %v1001 = vadd.f32 %v367, %v1000
        %v1002 = vpop.f32.mrb[0].mxu0
        %v1003 = vpop.f32.mrb[0].mxu0
        %v1004 = vadd.f32 %v367, %v1003
        %v1005 = vpop.f32.mrb[0].mxu0
        %1006 = vmatprep.mubr.bf16.mxu0 0
        %1007 = vmatmul.mubr.bf16.gmra.mrb[0].mxu0 %v733
        %v1008 = vpop.f32.mrb[0].mxu0
        %v1009 = vadd.f32 %v367, %v1008
        %v1010 = vpop.f32.mrb[0].mxu0
        %v1011 = vpop.f32.mrb[0].mxu0
        %v1012 = vadd.f32 %v367, %v1011
        %v1013 = vpop.f32.mrb[0].mxu0
        %1014 = vmatprep.mubr.bf16.mxu0 0
        %1015 = vmatmul.mubr.bf16.gmra.mrb[0].mxu0 %v736
        %v1016 = vpop.f32.mrb[0].mxu0
        %v1017 = vadd.f32 %v367, %v1016
        %v1018 = vpop.f32.mrb[0].mxu0
        %v1019 = vpop.f32.mrb[0].mxu0
        %v1020 = vadd.f32 %v367, %v1019
        %v1021 = vpop.f32.mrb[0].mxu0
        %1022 = vmatprep.mubr.bf16.mxu0 0
        %1023 = vmatmul.mubr.bf16.gmra.mrb[0].mxu0 %v739
        %v1024 = vpop.f32.mrb[0].mxu0
        %v1025 = vadd.f32 %v367, %v1024
        %v1026 = vpop.f32.mrb[0].mxu0
        %v1027 = vpop.f32.mrb[0].mxu0
        %v1028 = vadd.f32 %v367, %v1027
        %v1029 = vpop.f32.mrb[0].mxu0
        %1030 = vmatprep.mubr.bf16.mxu0 0
        %1031 = vmatmul.mubr.bf16.gmra.mrb[0].mxu0 %v742
        %v1032 = vpop.f32.mrb[0].mxu0
        %v1033 = vadd.f32 %v367, %v1032
        %v1034 = vpop.f32.mrb[0].mxu0
        %v1035 = vpop.f32.mrb[0].mxu0
        %v1036 = vadd.f32 %v367, %v1035
        %v1037 = vpop.f32.mrb[0].mxu0
        %1038 = vmatprep.mubr.bf16.mxu0 0
        %1039 = vmatmul.mubr.bf16.gmra.mrb[0].mxu0 %v745
        %v1040 = vpop.f32.mrb[0].mxu0
        %v1041 = vadd.f32 %v367, %v1040
        %v1042 = vpop.f32.mrb[0].mxu0
        %v1043 = vpop.f32.mrb[0].mxu0
        %v1044 = vadd.f32 %v367, %v1043
        %v1045 = vpop.f32.mrb[0].mxu0
        %1046 = vmatprep.mubr.bf16.mxu0 0
        %1047 = vmatmul.mubr.bf16.gmra.mrb[0].mxu0 %v748
        %v1048 = vpop.f32.mrb[0].mxu0
        %v1049 = vadd.f32 %v367, %v1048
        %v1050 = vpop.f32.mrb[0].mxu0
        %v1051 = vpop.f32.mrb[0].mxu0
        %v1052 = vadd.f32 %v367, %v1051
        %v1053 = vpop.f32.mrb[0].mxu0
        %1054 = vmatprep.mubr.bf16.mxu0 0
        %1055 = vmatmul.mubr.bf16.gmra.mrb[0].mxu0 %v751
        %v1056 = vpop.f32.mrb[0].mxu0
        %v1057 = vadd.f32 %v367, %v1056
        %v1058 = vpop.f32.mrb[0].mxu0
        %v1059 = vpop.f32.mrb[0].mxu0
        %v1060 = vadd.f32 %v367, %v1059
        %v1061 = vpop.f32.mrb[0].mxu0
        %1062 = vmatprep.mubr.bf16.mxu0 0
        %1063 = vmatmul.mubr.bf16.gmra.mrb[0].mxu0 %v754
        %v1064 = vpop.f32.mrb[0].mxu0
        %v1065 = vadd.f32 %v367, %v1064
        %v1066 = vpop.f32.mrb[0].mxu0
        %v1067 = vpop.f32.mrb[0].mxu0
        %v1068 = vadd.f32 %v367, %v1067
        %v1069 = vpop.f32.mrb[0].mxu0
        %1070 = vmatprep.mubr.bf16.mxu0 0
        %1071 = vmatmul.mubr.bf16.gmra.mrb[0].mxu0 %v757
        %v1072 = vpop.f32.mrb[0].mxu0
        %v1073 = vadd.f32 %v367, %v1072
        %v1074 = vpop.f32.mrb[0].mxu0
        %v1075 = vpop.f32.mrb[0].mxu0
        %v1076 = vadd.f32 %v367, %v1075
        %v1077 = vpop.f32.mrb[0].mxu0
        %1078 = vmatprep.mubr.bf16.mxu0 0
        %1079 = vmatmul.mubr.bf16.gmra.mrb[0].mxu0 %v760
        %v1080 = vpop.f32.mrb[0].mxu0
        %v1081 = vadd.f32 %v367, %v1080
        %v1082 = vpop.f32.mrb[0].mxu0
        %v1083 = vpop.f32.mrb[0].mxu0
        %v1084 = vadd.f32 %v367, %v1083
        %v1085 = vpop.f32.mrb[0].mxu0
        %1086 = vmatprep.mubr.bf16.mxu0 0
        %1087 = vmatmul.mubr.bf16.gmra.mrb[0].mxu0 %v763
        %v1088 = vpop.f32.mrb[0].mxu0
        %v1089 = vadd.f32 %v367, %v1088
        %v1090 = vpop.f32.mrb[0].mxu0
        %v1091 = vpop.f32.mrb[0].mxu0
        %v1092 = vadd.f32 %v367, %v1091
        %v1093 = vpop.f32.mrb[0].mxu0
        %1094 = vmatprep.mubr.bf16.mxu0 0
        %1095 = vmatmul.mubr.bf16.gmra.mrb[0].mxu0 %v766
        %v1096 = vpop.f32.mrb[0].mxu0
        %v1097 = vadd.f32 %v367, %v1096
        %v1098 = vpop.f32.mrb[0].mxu0
        %v1099 = vpop.f32.mrb[0].mxu0
        %v1100 = vadd.f32 %v367, %v1099
        %v1101 = vpop.f32.mrb[0].mxu0
        %1102 = vmatprep.mubr.bf16.mxu0 0
        %1103 = vmatmul.mubr.bf16.gmra.mrb[0].mxu0 %v769
        %v1104 = vpop.f32.mrb[0].mxu0
        %v1105 = vadd.f32 %v367, %v1104
        %v1106 = vpop.f32.mrb[0].mxu0
        %v1107 = vpop.f32.mrb[0].mxu0
        %v1108 = vadd.f32 %v367, %v1107
        %v1109 = vpop.f32.mrb[0].mxu0
        %1110 = vmatprep.mubr.bf16.mxu0 0
        %1111 = vmatmul.mubr.bf16.gmra.mrb[0].mxu0 %v772
        %v1112 = vpop.f32.mrb[0].mxu0
        %v1113 = vadd.f32 %v367, %v1112
        %v1114 = vpop.f32.mrb[0].mxu0
        %v1115 = vpop.f32.mrb[0].mxu0
        %v1116 = vadd.f32 %v367, %v1115
        %v1117 = vpop.f32.mrb[0].mxu0
        %1118 = vmatprep.mubr.bf16.mxu0 0
        %1119 = vmatmul.mubr.bf16.gmra.mrb[0].mxu0 %v775
        %v1120 = vpop.f32.mrb[0].mxu0
        %v1121 = vadd.f32 %v367, %v1120
        %v1122 = vpop.f32.mrb[0].mxu0
        %v1123 = vpop.f32.mrb[0].mxu0
        %v1124 = vadd.f32 %v367, %v1123
        %v1125 = vpop.f32.mrb[0].mxu0
        %1126 = vmatprep.mubr.bf16.mxu0 0
        %1127 = vmatmul.mubr.bf16.gmra.mrb[0].mxu0 %v778
        %v1128 = vpop.f32.mrb[0].mxu0
        %v1129 = vadd.f32 %v367, %v1128
        %v1130 = vpop.f32.mrb[0].mxu0
        %v1131 = vpop.f32.mrb[0].mxu0
        %v1132 = vadd.f32 %v367, %v1131
        %v1133 = vpop.f32.mrb[0].mxu0
        %1134 = vmatprep.mubr.bf16.mxu0 0
        %1135 = vmatmul.mubr.bf16.gmra.mrb[0].mxu0 %v781
        %v1136 = vpop.f32.mrb[0].mxu0
        %v1137 = vadd.f32 %v367, %v1136
        %v1138 = vpop.f32.mrb[0].mxu0
        %v1139 = vpop.f32.mrb[0].mxu0
        %v1140 = vadd.f32 %v367, %v1139
        %v1141 = vpop.f32.mrb[0].mxu0
        %1142 = vmatprep.mubr.bf16.mxu0 0
        %1143 = vmatmul.mubr.bf16.gmra.mrb[0].mxu0 %v784
        %v1144 = vpop.f32.mrb[0].mxu0
        %v1145 = vadd.f32 %v367, %v1144
        %v1146 = vpop.f32.mrb[0].mxu0
        %v1147 = vpop.f32.mrb[0].mxu0
        %v1148 = vadd.f32 %v367, %v1147
        %v1149 = vpop.f32.mrb[0].mxu0
        %1150 = vmatprep.mubr.bf16.mxu0 0
        %1151 = vmatmul.mubr.bf16.gmra.mrb[0].mxu0 %v787
        %v1152 = vpop.f32.mrb[0].mxu0
        %v1153 = vadd.f32 %v367, %v1152
        %v1154 = vpop.f32.mrb[0].mxu0
        %v1155 = vpop.f32.mrb[0].mxu0
        %v1156 = vadd.f32 %v367, %v1155
        %v1157 = vpop.f32.mrb[0].mxu0
        %1158 = vmatprep.mubr.bf16.mxu0 0
        %1159 = vmatmul.mubr.bf16.gmra.mrb[0].mxu0 %v790
        %v1160 = vpop.f32.mrb[0].mxu0
        %v1161 = vadd.f32 %v367, %v1160
        %v1162 = vpop.f32.mrb[0].mxu0
        %v1163 = vpop.f32.mrb[0].mxu0
        %v1164 = vadd.f32 %v367, %v1163
        %v1165 = vpop.f32.mrb[0].mxu0
        %1166 = vmatprep.mubr.bf16.mxu0 0
        %1167 = vmatmul.mubr.bf16.gmra.mrb[0].mxu0 %v793
        %v1168 = vpop.f32.mrb[0].mxu0
        %v1169 = vadd.f32 %v367, %v1168
        %v1170 = vpop.f32.mrb[0].mxu0
        %v1171 = vpop.f32.mrb[0].mxu0
        %v1172 = vadd.f32 %v367, %v1171
        %v1173 = vpop.f32.mrb[0].mxu0
        %1174 = vmatprep.mubr.bf16.mxu0 0
        %1175 = vmatmul.mubr.bf16.gmra.mrb[0].mxu0 %v796
        %v1176 = vpop.f32.mrb[0].mxu0
        %v1177 = vadd.f32 %v367, %v1176
        %v1178 = vpop.f32.mrb[0].mxu0
        %v1179 = vpop.f32.mrb[0].mxu0
        %v1180 = vadd.f32 %v367, %v1179
        %v1181 = vpop.f32.mrb[0].mxu0
        %1182 = vmatprep.mubr.bf16.mxu0 0
        %1183 = vmatmul.mubr.bf16.gmra.mrb[0].mxu0 %v799
        %v1184 = vpop.f32.mrb[0].mxu0
        %v1185 = vadd.f32 %v367, %v1184
        %v1186 = vpop.f32.mrb[0].mxu0
        %v1187 = vpop.f32.mrb[0].mxu0
        %v1188 = vadd.f32 %v367, %v1187
        %v1189 = vpop.f32.mrb[0].mxu0
        %1190 = vmatprep.mubr.bf16.mxu0 0
        %1191 = vmatmul.mubr.bf16.gmra.mrb[0].mxu0 %v802
        %v1192 = vpop.f32.mrb[0].mxu0
        %v1193 = vadd.f32 %v367, %v1192
        %v1194 = vpop.f32.mrb[0].mxu0
        %v1195 = vpop.f32.mrb[0].mxu0
        %v1196 = vadd.f32 %v367, %v1195
        %v1197 = vpop.f32.mrb[0].mxu0
        %1198 = vmatprep.mubr.bf16.mxu0 0
        %1199 = vmatmul.mubr.bf16.gmra.mrb[0].mxu0 %v805
        %v1200 = vpop.f32.mrb[0].mxu0
        %v1201 = vadd.f32 %v367, %v1200
        %v1202 = vpop.f32.mrb[0].mxu0
        %v1203 = vpop.f32.mrb[0].mxu0
        %v1204 = vadd.f32 %v367, %v1203
        %v1205 = vpop.f32.mrb[0].mxu0
        %1206 = vmatprep.mubr.bf16.mxu0 0
        %1207 = vmatmul.mubr.bf16.gmra.mrb[0].mxu0 %v808
        %v1208 = vpop.f32.mrb[0].mxu0
        %v1209 = vadd.f32 %v367, %v1208
        %v1210 = vpop.f32.mrb[0].mxu0
        %v1211 = vpop.f32.mrb[0].mxu0
        %v1212 = vadd.f32 %v367, %v1211
        %v1213 = vpop.f32.mrb[0].mxu0
        %1214 = vmatprep.mubr.bf16.mxu0 0
        %1215 = vmatmul.mubr.bf16.gmra.mrb[0].mxu0 %v811
        %v1216 = vpop.f32.mrb[0].mxu0
        %v1217 = vadd.f32 %v367, %v1216
        %v1218 = vpop.f32.mrb[0].mxu0
        %v1219 = vpop.f32.mrb[0].mxu0
        %v1220 = vadd.f32 %v367, %v1219
        %v1221 = vpop.f32.mrb[0].mxu0
        %1222 = vmatprep.mubr.bf16.mxu0 0
        %1223 = vmatmul.mubr.bf16.gmra.mrb[0].mxu0 %v814
        %v1224 = vpop.f32.mrb[0].mxu0
        %v1225 = vadd.f32 %v367, %v1224
        %v1226 = vpop.f32.mrb[0].mxu0
        %v1227 = vpop.f32.mrb[0].mxu0
        %v1228 = vadd.f32 %v367, %v1227
        %v1229 = vpop.f32.mrb[0].mxu0
        %1230 = vmatprep.mubr.bf16.mxu0 0
        %1231 = vmatmul.mubr.bf16.gmra.mrb[0].mxu0 %v817
        %v1232 = vpop.f32.mrb[0].mxu0
        %v1233 = vadd.f32 %v367, %v1232
        %v1234 = vpop.f32.mrb[0].mxu0
        %v1235 = vpop.f32.mrb[0].mxu0
        %v1236 = vadd.f32 %v367, %v1235
        %v1237 = vpop.f32.mrb[0].mxu0
        %1238 = vmatprep.mubr.bf16.mxu0 0
        %1239 = vmatmul.mubr.bf16.gmra.mrb[0].mxu0 %v820
        %v1240 = vpop.f32.mrb[0].mxu0
        %v1241 = vadd.f32 %v367, %v1240
        %v1242 = vpop.f32.mrb[0].mxu0
        %v1243 = vpop.f32.mrb[0].mxu0
        %v1244 = vadd.f32 %v367, %v1243
        %v1245 = vpop.f32.mrb[0].mxu0
        %1246 = vmatprep.mubr.bf16.mxu0 0
        %1247 = vmatmul.mubr.bf16.gmra.mrb[0].mxu0 %v823
        %v1248 = vpop.f32.mrb[0].mxu0
        %v1249 = vadd.f32 %v367, %v1248
        %v1250 = vpop.f32.mrb[0].mxu0
        %v1251 = vpop.f32.mrb[0].mxu0
        %v1252 = vadd.f32 %v367, %v1251
        %v1253 = vpop.f32.mrb[0].mxu0
        %1254 = vmatprep.mubr.bf16.mxu0 0
        %1255 = vmatmul.mubr.bf16.gmra.mrb[0].mxu0 %v826
        %v1256 = vpop.f32.mrb[0].mxu0
        %v1257 = vadd.f32 %v367, %v1256
        %v1258 = vpop.f32.mrb[0].mxu0
        %v1259 = vpop.f32.mrb[0].mxu0
        %v1260 = vadd.f32 %v367, %v1259
        %v1261 = vpop.f32.mrb[0].mxu0
        %1262 = vmatprep.mubr.bf16.mxu0 0
        %1263 = vmatmul.mubr.bf16.gmra.mrb[0].mxu0 %v829
        %v1264 = vpop.f32.mrb[0].mxu0
        %v1265 = vadd.f32 %v367, %v1264
        %v1266 = vpop.f32.mrb[0].mxu0
        %v1267 = vpop.f32.mrb[0].mxu0
        %v1268 = vadd.f32 %v367, %v1267
        %v1269 = vpop.f32.mrb[0].mxu0
        %1270 = vmatprep.mubr.bf16.mxu0 0
        %1271 = vmatmul.mubr.bf16.gmra.mrb[0].mxu0 %v832
        %v1272 = vpop.f32.mrb[0].mxu0
        %v1273 = vadd.f32 %v367, %v1272
        %v1274 = vpop.f32.mrb[0].mxu0
        %v1275 = vpop.f32.mrb[0].mxu0
        %v1276 = vadd.f32 %v367, %v1275
        %v1277 = vpop.f32.mrb[0].mxu0
        %1278 = vmatprep.mubr.bf16.mxu0 0
        %1279 = vmatmul.mubr.bf16.gmra.mrb[0].mxu0 %v835
        %v1280 = vpop.f32.mrb[0].mxu0
        %v1281 = vadd.f32 %v367, %v1280
        %v1282 = vpop.f32.mrb[0].mxu0
        %v1283 = vpop.f32.mrb[0].mxu0
        %v1284 = vadd.f32 %v367, %v1283
        %v1285 = vpop.f32.mrb[0].mxu0
        %1286 = vmatprep.mubr.bf16.mxu0 0
        %1287 = vmatmul.mubr.bf16.gmra.mrb[0].mxu0 %v838
        %v1288 = vpop.f32.mrb[0].mxu0
        %v1289 = vadd.f32 %v367, %v1288
        %v1290 = vpop.f32.mrb[0].mxu0
        %v1291 = vpop.f32.mrb[0].mxu0
        %v1292 = vadd.f32 %v367, %v1291
        %v1293 = vpop.f32.mrb[0].mxu0
        %1294 = vmatprep.mubr.bf16.mxu0 0
        %1295 = vmatmul.mubr.bf16.gmra.mrb[0].mxu0 %v841
        %v1296 = vpop.f32.mrb[0].mxu0
        %v1297 = vadd.f32 %v367, %v1296
        %v1298 = vpop.f32.mrb[0].mxu0
        %v1299 = vpop.f32.mrb[0].mxu0
        %v1300 = vadd.f32 %v367, %v1299
        %v1301 = vpop.f32.mrb[0].mxu0
        %1302 = vmatprep.mubr.bf16.mxu0 0
        %1303 = vmatmul.mubr.bf16.gmra.mrb[0].mxu0 %v844
        %v1304 = vpop.f32.mrb[0].mxu0
        %v1305 = vadd.f32 %v367, %v1304
        %v1306 = vpop.f32.mrb[0].mxu0
        %v1307 = vpop.f32.mrb[0].mxu0
        %v1308 = vadd.f32 %v367, %v1307
        %v1309 = vpop.f32.mrb[0].mxu0
        %1310 = vmatprep.mubr.bf16.mxu0 0
        %1311 = vmatmul.mubr.bf16.gmra.mrb[0].mxu0 %v847
        %v1312 = vpop.f32.mrb[0].mxu0
        %v1313 = vadd.f32 %v367, %v1312
        %v1314 = vpop.f32.mrb[0].mxu0
        %v1315 = vpop.f32.mrb[0].mxu0
        %v1316 = vadd.f32 %v367, %v1315
        %v1317 = vpop.f32.mrb[0].mxu0
        %1318 = vmatprep.mubr.bf16.mxu0 0
        %1319 = vmatmul.mubr.bf16.gmra.mrb[0].mxu0 %v850
        %v1320 = vpop.f32.mrb[0].mxu0
        %v1321 = vadd.f32 %v367, %v1320
        %v1322 = vpop.f32.mrb[0].mxu0
        %v1323 = vpop.f32.mrb[0].mxu0
        %v1324 = vadd.f32 %v367, %v1323
        %v1325 = vpop.f32.mrb[0].mxu0
        %1326 = vmatprep.mubr.bf16.mxu0 0
        %1327 = vmatmul.mubr.bf16.gmra.mrb[0].mxu0 %v853
        %v1328 = vpop.f32.mrb[0].mxu0
        %v1329 = vadd.f32 %v367, %v1328
        %v1330 = vpop.f32.mrb[0].mxu0
        %v1331 = vpop.f32.mrb[0].mxu0
        %v1332 = vadd.f32 %v367, %v1331
        %v1333 = vpop.f32.mrb[0].mxu0
        %1334 = vmatprep.mubr.bf16.mxu0 0
        %1335 = vmatmul.mubr.bf16.gmra.mrb[0].mxu0 %v856
        %v1336 = vpop.f32.mrb[0].mxu0
        %v1337 = vadd.f32 %v367, %v1336
        %v1338 = vpop.f32.mrb[0].mxu0
        %v1339 = vpop.f32.mrb[0].mxu0
        %v1340 = vadd.f32 %v367, %v1339
        %v1341 = vpop.f32.mrb[0].mxu0
        %1342 = vmatprep.mubr.bf16.mxu0 0
        %1343 = vmatmul.mubr.bf16.gmra.mrb[0].mxu0 %v859
        %v1344 = vpop.f32.mrb[0].mxu0
        %v1345 = vadd.f32 %v367, %v1344
        %v1346 = vpop.f32.mrb[0].mxu0
        %v1347 = vpop.f32.mrb[0].mxu0
        %v1348 = vadd.f32 %v367, %v1347
        %v1349 = vpop.f32.mrb[0].mxu0
        %1350 = vmatprep.mubr.bf16.mxu0 0
        %1351 = vmatmul.mubr.bf16.gmra.mrb[0].mxu0 %v862
        %v1352 = vpop.f32.mrb[0].mxu0
        %v1353 = vadd.f32 %v367, %v1352
        %v1354 = vpop.f32.mrb[0].mxu0
        %v1355 = vpop.f32.mrb[0].mxu0
        %v1356 = vadd.f32 %v367, %v1355
        %v1357 = vpop.f32.mrb[0].mxu0
        %1358 = vmatprep.mubr.bf16.mxu0 0
        %1359 = vmatmul.mubr.bf16.gmra.mrb[0].mxu0 %v865
        %v1360 = vpop.f32.mrb[0].mxu0
        %v1361 = vadd.f32 %v367, %v1360
        %v1362 = vpop.f32.mrb[0].mxu0
        %v1363 = vpop.f32.mrb[0].mxu0
        %v1364 = vadd.f32 %v367, %v1363
        %v1365 = vpop.f32.mrb[0].mxu0
        %1366 = vmatprep.mubr.bf16.mxu0 0
        %1367 = vmatmul.mubr.bf16.gmra.mrb[0].mxu0 %v868
        %v1368 = vpop.f32.mrb[0].mxu0
        %v1369 = vadd.f32 %v367, %v1368
        %v1370 = vpop.f32.mrb[0].mxu0
        %v1371 = vpop.f32.mrb[0].mxu0
        %v1372 = vadd.f32 %v367, %v1371
        %v1373 = vpop.f32.mrb[0].mxu0
        %1374 = vmatprep.mubr.bf16.mxu0 0
        %1375 = vmatmul.mubr.bf16.gmra.mrb[0].mxu0 %v871
        %v1376 = vpop.f32.mrb[0].mxu0
        %v1377 = vadd.f32 %v367, %v1376
        %v1378 = vpop.f32.mrb[0].mxu0
        %v1379 = vpop.f32.mrb[0].mxu0
        %v1380 = vadd.f32 %v367, %v1379
        %v1381 = vpop.f32.mrb[0].mxu0
        %1382 = vmatprep.mubr.bf16.mxu0 0
        %1383 = vmatmul.mubr.bf16.gmra.mrb[0].mxu0 %v874
        %v1384 = vpop.f32.mrb[0].mxu0
        %v1385 = vadd.f32 %v367, %v1384
        %v1386 = vpop.f32.mrb[0].mxu0
        %v1387 = vpop.f32.mrb[0].mxu0
        %v1388 = vadd.f32 %v367, %v1387
        %v1389 = vpop.f32.mrb[0].mxu0
        %1390 = vmatprep.mubr.bf16.mxu0 0
        %1391 = vmatmul.mubr.bf16.gmra.mrb[0].mxu0 %v877
        %v1392 = vpop.f32.mrb[0].mxu0
        %v1393 = vadd.f32 %v367, %v1392
        %v1394 = vpop.f32.mrb[0].mxu0
        %v1395 = vpop.f32.mrb[0].mxu0
        %v1396 = vadd.f32 %v367, %v1395
        %v1397 = vpop.f32.mrb[0].mxu0
        %1398 = vmatprep.mubr.bf16.mxu0 0
        %1399 = vmatmul.mubr.bf16.gmra.mrb[0].mxu0 %v880
        %v1400 = vpop.f32.mrb[0].mxu0
        %v1401 = vadd.f32 %v367, %v1400
        %v1402 = vpop.f32.mrb[0].mxu0
        %v1403 = vpop.f32.mrb[0].mxu0
        %v1404 = vadd.f32 %v367, %v1403
        %v1405 = vpop.f32.mrb[0].mxu0
        %1406 = vmatprep.mubr.bf16.mxu0 0
        %1407 = vmatmul.mubr.bf16.gmra.mrb[0].mxu0 %v883
        %v1408 = vpop.f32.mrb[0].mxu0
        %v1409 = vadd.f32 %v367, %v1408
        %v1410 = vpop.f32.mrb[0].mxu0
        %v1411 = vpop.f32.mrb[0].mxu0
        %v1412 = vadd.f32 %v367, %v1411
        %v1413 = vpop.f32.mrb[0].mxu0
        %1414 = vmatprep.mubr.bf16.mxu0 0
        %1415 = vmatmul.mubr.bf16.gmra.mrb[0].mxu0 %v886
        %v1416 = vpop.f32.mrb[0].mxu0
        %v1417 = vadd.f32 %v367, %v1416
        %v1418 = vpop.f32.mrb[0].mxu0
        %v1419 = vpop.f32.mrb[0].mxu0
        %v1420 = vadd.f32 %v367, %v1419
        %v1421 = vpop.f32.mrb[0].mxu0
        %1422 = vmatprep.mubr.bf16.mxu0 0
        %1423 = vmatmul.mubr.bf16.gmra.mrb[0].mxu0 %v889
        %v1424 = vpop.f32.mrb[0].mxu0
        %v1425 = vadd.f32 %v367, %v1424
        %v1426 = vpop.f32.mrb[0].mxu0
        %v1427 = vpop.f32.mrb[0].mxu0
        %v1428 = vadd.f32 %v367, %v1427
        %v1429 = vpop.f32.mrb[0].mxu0
        %1430 = vmatprep.mubr.bf16.mxu0 0
        %1431 = vmatmul.mubr.bf16.gmra.mrb[0].mxu0 %v892
        %v1432 = vpop.f32.mrb[0].mxu0
        %v1433 = vadd.f32 %v367, %v1432
        %v1434 = vpop.f32.mrb[0].mxu0
        %v1435 = vpop.f32.mrb[0].mxu0
        %v1436 = vadd.f32 %v367, %v1435
        %v1437 = vpop.f32.mrb[0].mxu0
        %1438 = vdwg.mxu0
        %v1439 = vmax.f32 %v929, 0.0
        %v1440 = vmax.f32 %v932, 0.0
        %v1441 = vmax.f32 %v937, 0.0
        %v1442 = vmax.f32 %v940, 0.0
        %v1443 = vmax.f32 %v945, 0.0
        %v1444 = vmax.f32 %v948, 0.0
        %v1445 = vmax.f32 %v953, 0.0
        %v1446 = vmax.f32 %v956, 0.0
        %v1447 = vmax.f32 %v961, 0.0
        %v1448 = vmax.f32 %v964, 0.0
        %v1449 = vmax.f32 %v969, 0.0
        %v1450 = vmax.f32 %v972, 0.0
        %v1451 = vmax.f32 %v977, 0.0
        %v1452 = vmax.f32 %v980, 0.0
        %v1453 = vmax.f32 %v985, 0.0
        %v1454 = vmax.f32 %v988, 0.0
        %v1455 = vmax.f32 %v993, 0.0
        %v1456 = vmax.f32 %v996, 0.0
        %v1457 = vmax.f32 %v1001, 0.0
        %v1458 = vmax.f32 %v1004, 0.0
        %v1459 = vmax.f32 %v1009, 0.0
        %v1460 = vmax.f32 %v1012, 0.0
        %v1461 = vmax.f32 %v1017, 0.0
        %v1462 = vmax.f32 %v1020, 0.0
        %v1463 = vmax.f32 %v1025, 0.0
        %v1464 = vmax.f32 %v1028, 0.0
        %v1465 = vmax.f32 %v1033, 0.0
        %v1466 = vmax.f32 %v1036, 0.0
        %v1467 = vmax.f32 %v1041, 0.0
        %v1468 = vmax.f32 %v1044, 0.0
        %v1469 = vmax.f32 %v1049, 0.0
        %v1470 = vmax.f32 %v1052, 0.0
        %v1471 = vmax.f32 %v1057, 0.0
        %v1472 = vmax.f32 %v1060, 0.0
        %v1473 = vmax.f32 %v1065, 0.0
        %v1474 = vmax.f32 %v1068, 0.0
        %v1475 = vmax.f32 %v1073, 0.0
        %v1476 = vmax.f32 %v1076, 0.0
        %v1477 = vmax.f32 %v1081, 0.0
        %v1478 = vmax.f32 %v1084, 0.0
        %v1479 = vmax.f32 %v1089, 0.0
        %v1480 = vmax.f32 %v1092, 0.0
        %v1481 = vmax.f32 %v1097, 0.0
        %v1482 = vmax.f32 %v1100, 0.0
        %v1483 = vmax.f32 %v1105, 0.0
        %v1484 = vmax.f32 %v1108, 0.0
        %v1485 = vmax.f32 %v1113, 0.0
        %v1486 = vmax.f32 %v1116, 0.0
        %v1487 = vmax.f32 %v1121, 0.0
        %v1488 = vmax.f32 %v1124, 0.0
        %v1489 = vmax.f32 %v1129, 0.0
        %v1490 = vmax.f32 %v1132, 0.0
        %v1491 = vmax.f32 %v1137, 0.0
        %v1492 = vmax.f32 %v1140, 0.0
        %v1493 = vmax.f32 %v1145, 0.0
        %v1494 = vmax.f32 %v1148, 0.0
        %v1495 = vmax.f32 %v1153, 0.0
        %v1496 = vmax.f32 %v1156, 0.0
        %v1497 = vmax.f32 %v1161, 0.0
        %v1498 = vmax.f32 %v1164, 0.0
        %v1499 = vmax.f32 %v1169, 0.0
        %v1500 = vmax.f32 %v1172, 0.0
        %v1501 = vmax.f32 %v1177, 0.0
        %v1502 = vmax.f32 %v1180, 0.0
        %v1503 = vmax.f32 %v1185, 0.0
        %v1504 = vmax.f32 %v1188, 0.0
        %v1505 = vmax.f32 %v1193, 0.0
        %v1506 = vmax.f32 %v1196, 0.0
        %v1507 = vmax.f32 %v1201, 0.0
        %v1508 = vmax.f32 %v1204, 0.0
        %v1509 = vmax.f32 %v1209, 0.0
        %v1510 = vmax.f32 %v1212, 0.0
        %v1511 = vmax.f32 %v1217, 0.0
        %v1512 = vmax.f32 %v1220, 0.0
        %v1513 = vmax.f32 %v1225, 0.0
        %v1514 = vmax.f32 %v1228, 0.0
        %v1515 = vmax.f32 %v1233, 0.0
        %v1516 = vmax.f32 %v1236, 0.0
        %v1517 = vmax.f32 %v1241, 0.0
        %v1518 = vmax.f32 %v1244, 0.0
        %v1519 = vmax.f32 %v1249, 0.0
        %v1520 = vmax.f32 %v1252, 0.0
        %v1521 = vmax.f32 %v1257, 0.0
        %v1522 = vmax.f32 %v1260, 0.0
        %v1523 = vmax.f32 %v1265, 0.0
        %v1524 = vmax.f32 %v1268, 0.0
        %v1525 = vmax.f32 %v1273, 0.0
        %v1526 = vmax.f32 %v1276, 0.0
        %v1527 = vmax.f32 %v1281, 0.0
        %v1528 = vmax.f32 %v1284, 0.0
        %v1529 = vmax.f32 %v1289, 0.0
        %v1530 = vmax.f32 %v1292, 0.0
        %v1531 = vmax.f32 %v1297, 0.0
        %v1532 = vmax.f32 %v1300, 0.0
        %v1533 = vmax.f32 %v1305, 0.0
        %v1534 = vmax.f32 %v1308, 0.0
        %v1535 = vmax.f32 %v1313, 0.0
        %v1536 = vmax.f32 %v1316, 0.0
        %v1537 = vmax.f32 %v1321, 0.0
        %v1538 = vmax.f32 %v1324, 0.0
        %v1539 = vmax.f32 %v1329, 0.0
        %v1540 = vmax.f32 %v1332, 0.0
        %v1541 = vmax.f32 %v1337, 0.0
        %v1542 = vmax.f32 %v1340, 0.0
        %v1543 = vmax.f32 %v1345, 0.0
        %v1544 = vmax.f32 %v1348, 0.0
        %v1545 = vmax.f32 %v1353, 0.0
        %v1546 = vmax.f32 %v1356, 0.0
        %v1547 = vmax.f32 %v1361, 0.0
        %v1548 = vmax.f32 %v1364, 0.0
        %v1549 = vmax.f32 %v1369, 0.0
        %v1550 = vmax.f32 %v1372, 0.0
        %v1551 = vmax.f32 %v1377, 0.0
        %v1552 = vmax.f32 %v1380, 0.0
        %v1553 = vmax.f32 %v1385, 0.0
        %v1554 = vmax.f32 %v1388, 0.0
        %v1555 = vmax.f32 %v1393, 0.0
        %v1556 = vmax.f32 %v1396, 0.0
        %v1557 = vmax.f32 %v1401, 0.0
        %v1558 = vmax.f32 %v1404, 0.0
        %v1559 = vmax.f32 %v1409, 0.0
        %v1560 = vmax.f32 %v1412, 0.0
        %v1561 = vmax.f32 %v1417, 0.0
        %v1562 = vmax.f32 %v1420, 0.0
        %v1563 = vmax.f32 %v1425, 0.0
        %v1564 = vmax.f32 %v1428, 0.0
        %v1565 = vmax.f32 %v1433, 0.0
        %v1566 = vmax.f32 %v1436, 0.0
        %v1567 = vadd.f32 %v1439, %v1440
        %v1568 = vadd.f32 %v1567, %v1441
        %v1569 = vadd.f32 %v1568, %v1442
        %v1570 = vadd.f32 %v1569, %v1443
        %v1571 = vadd.f32 %v1570, %v1444
        %v1572 = vadd.f32 %v1571, %v1445
        %v1573 = vadd.f32 %v1572, %v1446
        %v1574 = vadd.f32 %v1573, %v1447
        %v1575 = vadd.f32 %v1574, %v1448
        %v1576 = vadd.f32 %v1575, %v1449
        %v1577 = vadd.f32 %v1576, %v1450
        %v1578 = vadd.f32 %v1577, %v1451
        %v1579 = vadd.f32 %v1578, %v1452
        %v1580 = vadd.f32 %v1579, %v1453
        %v1581 = vadd.f32 %v1580, %v1454
        %v1582 = vadd.f32 %v1581, %v1455
        %v1583 = vadd.f32 %v1582, %v1456
        %v1584 = vadd.f32 %v1583, %v1457
        %v1585 = vadd.f32 %v1584, %v1458
        %v1586 = vadd.f32 %v1585, %v1459
        %v1587 = vadd.f32 %v1586, %v1460
        %v1588 = vadd.f32 %v1587, %v1461
        %v1589 = vadd.f32 %v1588, %v1462
        %v1590 = vadd.f32 %v1589, %v1463
        %v1591 = vadd.f32 %v1590, %v1464
        %v1592 = vadd.f32 %v1591, %v1465
        %v1593 = vadd.f32 %v1592, %v1466
        %v1594 = vadd.f32 %v1593, %v1467
        %v1595 = vadd.f32 %v1594, %v1468
        %v1596 = vadd.f32 %v1595, %v1469
        %v1597 = vadd.f32 %v1596, %v1470
        %v1598 = vrot.slane %v1597, 4
        %v1599 = vadd.f32 %v1597, %v1598
        %v1600 = vrot.slane %v1599, 2
        %v1601 = vadd.f32 %v1599, %v1600
        %v1602 = vrot.slane %v1601, 1
        %v1603 = vadd.f32 %v1601, %v1602
        %v1604 = vadd.f32 %v1471, %v1472
        %v1605 = vadd.f32 %v1604, %v1473
        %v1606 = vadd.f32 %v1605, %v1474
        %v1607 = vadd.f32 %v1606, %v1475
        %v1608 = vadd.f32 %v1607, %v1476
        %v1609 = vadd.f32 %v1608, %v1477
        %v1610 = vadd.f32 %v1609, %v1478
        %v1611 = vadd.f32 %v1610, %v1479
        %v1612 = vadd.f32 %v1611, %v1480
        %v1613 = vadd.f32 %v1612, %v1481
        %v1614 = vadd.f32 %v1613, %v1482
        %v1615 = vadd.f32 %v1614, %v1483
        %v1616 = vadd.f32 %v1615, %v1484
        %v1617 = vadd.f32 %v1616, %v1485
        %v1618 = vadd.f32 %v1617, %v1486
        %v1619 = vadd.f32 %v1618, %v1487
        %v1620 = vadd.f32 %v1619, %v1488
        %v1621 = vadd.f32 %v1620, %v1489
        %v1622 = vadd.f32 %v1621, %v1490
        %v1623 = vadd.f32 %v1622, %v1491
        %v1624 = vadd.f32 %v1623, %v1492
        %v1625 = vadd.f32 %v1624, %v1493
        %v1626 = vadd.f32 %v1625, %v1494
        %v1627 = vadd.f32 %v1626, %v1495
        %v1628 = vadd.f32 %v1627, %v1496
        %v1629 = vadd.f32 %v1628, %v1497
        %v1630 = vadd.f32 %v1629, %v1498
        %v1631 = vadd.f32 %v1630, %v1499
        %v1632 = vadd.f32 %v1631, %v1500
        %v1633 = vadd.f32 %v1632, %v1501
        %v1634 = vadd.f32 %v1633, %v1502
        %v1635 = vrot.slane %v1634, 4
        %v1636 = vadd.f32 %v1634, %v1635
        %v1637 = vrot.slane %v1636, 2
        %v1638 = vadd.f32 %v1636, %v1637
        %v1639 = vrot.slane %v1638, 1
        %v1640 = vadd.f32 %v1638, %v1639
        %v1641 = vadd.f32 %v1503, %v1504
        %v1642 = vadd.f32 %v1641, %v1505
        %v1643 = vadd.f32 %v1642, %v1506
        %v1644 = vadd.f32 %v1643, %v1507
        %v1645 = vadd.f32 %v1644, %v1508
        %v1646 = vadd.f32 %v1645, %v1509
        %v1647 = vadd.f32 %v1646, %v1510
        %v1648 = vadd.f32 %v1647, %v1511
        %v1649 = vadd.f32 %v1648, %v1512
        %v1650 = vadd.f32 %v1649, %v1513
        %v1651 = vadd.f32 %v1650, %v1514
        %v1652 = vadd.f32 %v1651, %v1515
        %v1653 = vadd.f32 %v1652, %v1516
        %v1654 = vadd.f32 %v1653, %v1517
        %v1655 = vadd.f32 %v1654, %v1518
        %v1656 = vadd.f32 %v1655, %v1519
        %v1657 = vadd.f32 %v1656, %v1520
        %v1658 = vadd.f32 %v1657, %v1521
        %v1659 = vadd.f32 %v1658, %v1522
        %v1660 = vadd.f32 %v1659, %v1523
        %v1661 = vadd.f32 %v1660, %v1524
        %v1662 = vadd.f32 %v1661, %v1525
        %v1663 = vadd.f32 %v1662, %v1526
        %v1664 = vadd.f32 %v1663, %v1527
        %v1665 = vadd.f32 %v1664, %v1528
        %v1666 = vadd.f32 %v1665, %v1529
        %v1667 = vadd.f32 %v1666, %v1530
        %v1668 = vadd.f32 %v1667, %v1531
        %v1669 = vadd.f32 %v1668, %v1532
        %v1670 = vadd.f32 %v1669, %v1533
        %v1671 = vadd.f32 %v1670, %v1534
        %v1672 = vrot.slane %v1671, 4
        %v1673 = vadd.f32 %v1671, %v1672
        %v1674 = vrot.slane %v1673, 2
        %v1675 = vadd.f32 %v1673, %v1674
        %v1676 = vrot.slane %v1675, 1
        %v1677 = vadd.f32 %v1675, %v1676
        %v1678 = vadd.f32 %v1535, %v1536
        %v1679 = vadd.f32 %v1678, %v1537
        %v1680 = vadd.f32 %v1679, %v1538
        %v1681 = vadd.f32 %v1680, %v1539
        %v1682 = vadd.f32 %v1681, %v1540
        %v1683 = vadd.f32 %v1682, %v1541
        %v1684 = vadd.f32 %v1683, %v1542
        %v1685 = vadd.f32 %v1684, %v1543
        %v1686 = vadd.f32 %v1685, %v1544
        %v1687 = vadd.f32 %v1686, %v1545
        %v1688 = vadd.f32 %v1687, %v1546
        %v1689 = vadd.f32 %v1688, %v1547
        %v1690 = vadd.f32 %v1689, %v1548
        %v1691 = vadd.f32 %v1690, %v1549
        %v1692 = vadd.f32 %v1691, %v1550
        %v1693 = vadd.f32 %v1692, %v1551
        %v1694 = vadd.f32 %v1693, %v1552
        %v1695 = vadd.f32 %v1694, %v1553
        %v1696 = vadd.f32 %v1695, %v1554
        %v1697 = vadd.f32 %v1696, %v1555
        %v1698 = vadd.f32 %v1697, %v1556
        %v1699 = vadd.f32 %v1698, %v1557
        %v1700 = vadd.f32 %v1699, %v1558
        %v1701 = vadd.f32 %v1700, %v1559
        %v1702 = vadd.f32 %v1701, %v1560
        %v1703 = vadd.f32 %v1702, %v1561
        %v1704 = vadd.f32 %v1703, %v1562
        %v1705 = vadd.f32 %v1704, %v1563
        %v1706 = vadd.f32 %v1705, %v1564
        %v1707 = vadd.f32 %v1706, %v1565
        %v1708 = vadd.f32 %v1707, %v1566
        %v1709 = vrot.slane %v1708, 4
        %v1710 = vadd.f32 %v1708, %v1709
        %v1711 = vrot.slane %v1710, 2
        %v1712 = vadd.f32 %v1710, %v1711
        %v1713 = vrot.slane %v1712, 1
        %v1714 = vadd.f32 %v1712, %v1713
        %v1715 = vmul.f32 %v1603, 0.00390625
        %v1716 = vmul.f32 %v1640, 0.00390625
        %v1717 = vmul.f32 %v1677, 0.00390625
        %v1718 = vmul.f32 %v1714, 0.00390625
        %v1719 = vld [vmem:[%s3] sm:$0xff]
        %v1720 = vld [vmem:[%s3 + $0x8] sm:$0xff]
        %v1721 = vld [vmem:[%s3 + $0x10] sm:$0xff]
        %v1722 = vld [vmem:[%s3 + $0x18] sm:$0xff]
        %v1723 = vld [vmem:[%s3 + $0x20] sm:$0xff]
        %v1724 = vld [vmem:[%s3 + $0x28] sm:$0xff]
        %v1725 = vld [vmem:[%s3 + $0x30] sm:$0xff]
        %v1726 = vld [vmem:[%s3 + $0x38] sm:$0xff]
        %v1727 = vld [vmem:[%s3 + $0x40] sm:$0xff]
        %v1728 = vld [vmem:[%s3 + $0x48] sm:$0xff]
        %v1729 = vld [vmem:[%s3 + $0x50] sm:$0xff]
        %v1730 = vld [vmem:[%s3 + $0x58] sm:$0xff]
        %v1731 = vld [vmem:[%s3 + $0x60] sm:$0xff]
        %v1732 = vld [vmem:[%s3 + $0x68] sm:$0xff]
        %v1733 = vld [vmem:[%s3 + $0x70] sm:$0xff]
        %v1734 = vld [vmem:[%s3 + $0x78] sm:$0xff]
        %v1735 = vld [vmem:[%s3 + $0x80] sm:$0xff]
        %v1736 = vld [vmem:[%s3 + $0x88] sm:$0xff]
        %v1737 = vld [vmem:[%s3 + $0x90] sm:$0xff]
        %v1738 = vld [vmem:[%s3 + $0x98] sm:$0xff]
        %v1739 = vld [vmem:[%s3 + $0xa0] sm:$0xff]
        %v1740 = vld [vmem:[%s3 + $0xa8] sm:$0xff]
        %v1741 = vld [vmem:[%s3 + $0xb0] sm:$0xff]
        %v1742 = vld [vmem:[%s3 + $0xb8] sm:$0xff]
        %v1743 = vld [vmem:[%s3 + $0xc0] sm:$0xff]
        %v1744 = vld [vmem:[%s3 + $0xc8] sm:$0xff]
        %v1745 = vld [vmem:[%s3 + $0xd0] sm:$0xff]
        %v1746 = vld [vmem:[%s3 + $0xd8] sm:$0xff]
        %v1747 = vld [vmem:[%s3 + $0xe0] sm:$0xff]
        %v1748 = vld [vmem:[%s3 + $0xe8] sm:$0xff]
        %v1749 = vld [vmem:[%s3 + $0xf0] sm:$0xff]
        %v1750 = vld [vmem:[%s3 + $0xf8] sm:$0xff]
        %v1751 = vld [vmem:[%s3 + $0x100] sm:$0xff]
        %v1752 = vld [vmem:[%s3 + $0x108] sm:$0xff]
        %v1753 = vld [vmem:[%s3 + $0x110] sm:$0xff]
        %v1754 = vld [vmem:[%s3 + $0x118] sm:$0xff]
        %v1755 = vld [vmem:[%s3 + $0x120] sm:$0xff]
        %v1756 = vld [vmem:[%s3 + $0x128] sm:$0xff]
        %v1757 = vld [vmem:[%s3 + $0x130] sm:$0xff]
        %v1758 = vld [vmem:[%s3 + $0x138] sm:$0xff]
        %v1759 = vld [vmem:[%s3 + $0x140] sm:$0xff]
        %v1760 = vld [vmem:[%s3 + $0x148] sm:$0xff]
        %v1761 = vld [vmem:[%s3 + $0x150] sm:$0xff]
        %v1762 = vld [vmem:[%s3 + $0x158] sm:$0xff]
        %v1763 = vld [vmem:[%s3 + $0x160] sm:$0xff]
        %v1764 = vld [vmem:[%s3 + $0x168] sm:$0xff]
        %v1765 = vld [vmem:[%s3 + $0x170] sm:$0xff]
        %v1766 = vld [vmem:[%s3 + $0x178] sm:$0xff]
        %v1767 = vld [vmem:[%s4] sm:$0x7]
        %v1769 = vlaneseq
        %v1770 = vshrl.u32 %v1769, 7
        %v1771 = vsub.s32 0, %v1770
        %v1772 = vrot.slane %v1767, %v1771
        %v1773 = vlaneseq
        %v1774 = vshrl.u32 %v1773, 7
        %v1775 = vsub.s32 1, %v1774
        %v1776 = vrot.slane %v1767, %v1775
        %v1777 = vlaneseq
        %v1778 = vshrl.u32 %v1777, 7
        %v1779 = vsub.s32 2, %v1778
        %v1780 = vrot.slane %v1767, %v1779
        %vm1788 = vcmask 1041409
        %v1789 = vsel %vm1788, %v1716, %v1715
        %vm1790 = vcmask 1042434
        %v1791 = vsel %vm1790, %v1717, %v1789
        %vm1792 = vcmask 1043459
        %v1793 = vsel %vm1792, %v1718, %v1791
        %1795 = vmatprep.subr.mxu0 %v1720
        %1796 = vmatpush1.msra.mxu0 %v1719
        %1797 = vmatprep.subr.mxu0 %v1723
        %1798 = vmatpush1.msra.mxu0 %v1722
        %1799 = vmatprep.subr.mxu0 %v1726
        %1800 = vmatpush1.msra.mxu0 %v1725
        %1801 = vmatprep.subr.mxu0 %v1729
        %1802 = vmatpush1.msra.mxu0 %v1728
        %1803 = vmatprep.subr.mxu0 %v1732
        %1804 = vmatpush1.msra.mxu0 %v1731
        %1805 = vmatprep.subr.mxu0 %v1735
        %1806 = vmatpush1.msra.mxu0 %v1734
        %1807 = vmatprep.subr.mxu0 %v1738
        %1808 = vmatpush1.msra.mxu0 %v1737
        %1809 = vmatprep.subr.mxu0 %v1741
        %1810 = vmatpush1.msra.mxu0 %v1740
        %1811 = vmatprep.subr.mxu0 %v1744
        %1812 = vmatpush1.msra.mxu0 %v1743
        %1813 = vmatprep.subr.mxu0 %v1747
        %1814 = vmatpush1.msra.mxu0 %v1746
        %1815 = vmatprep.subr.mxu0 %v1750
        %1816 = vmatpush1.msra.mxu0 %v1749
        %1817 = vmatprep.subr.mxu0 %v1753
        %1818 = vmatpush1.msra.mxu0 %v1752
        %1819 = vmatprep.subr.mxu0 %v1756
        %1820 = vmatpush1.msra.mxu0 %v1755
        %1821 = vmatprep.subr.mxu0 %v1759
        %1822 = vmatpush1.msra.mxu0 %v1758
        %1823 = vmatprep.subr.mxu0 %v1762
        %1824 = vmatpush1.msra.mxu0 %v1761
        %1825 = vmatprep.subr.mxu0 %v1765
        %1826 = vmatpush1.msra.mxu0 %v1764
        %1827 = vmatprep.subr.mxu0 0.0
        %1828 = vmatpush1.msra.mxu0 0.0
        %1829 = vmatprep.subr.mxu0 0.0
        %1830 = vmatpush1.msra.mxu0 0.0
        %1831 = vmatprep.subr.mxu0 0.0
        %1832 = vmatpush1.msra.mxu0 0.0
        %1833 = vmatprep.subr.mxu0 0.0
        %1834 = vmatpush1.msra.mxu0 0.0
        %1835 = vmatprep.subr.mxu0 0.0
        %1836 = vmatpush1.msra.mxu0 0.0
        %1837 = vmatprep.subr.mxu0 0.0
        %1838 = vmatpush1.msra.mxu0 0.0
        %1839 = vmatprep.subr.mxu0 0.0
        %1840 = vmatpush1.msra.mxu0 0.0
        %1841 = vmatprep.subr.mxu0 0.0
        %1842 = vmatpush1.msra.mxu0 0.0
        %1843 = vmatprep.subr.mxu0 0.0
        %1844 = vmatpush1.msra.mxu0 0.0
        %1845 = vmatprep.subr.mxu0 0.0
        %1846 = vmatpush1.msra.mxu0 0.0
        %1847 = vmatprep.subr.mxu0 0.0
        %1848 = vmatpush1.msra.mxu0 0.0
        %1849 = vmatprep.subr.mxu0 0.0
        %1850 = vmatpush1.msra.mxu0 0.0
        %1851 = vmatprep.subr.mxu0 0.0
        %1852 = vmatpush1.msra.mxu0 0.0
        %1853 = vmatprep.subr.mxu0 0.0
        %1854 = vmatpush1.msra.mxu0 0.0
        %1855 = vmatprep.subr.mxu0 0.0
        %1856 = vmatpush1.msra.mxu0 0.0
        %1857 = vmatprep.subr.mxu0 0.0
        %1858 = vmatpush1.msra.mxu0 0.0
        %1859 = vmatprep.mubr.f32.mxu0 0.0
        %1860 = vmatmul.mubr.f32.gmra.mrb[0].mxu0 %v1793
        %v1861 = vpop.f32.mrb[0].mxu0
        %v1862 = vadd.f32 %v1772, %v1861
        %v1863 = vpop.f32.mrb[0].mxu0
        %v1864 = vadd.f32 %v1776, %v1863
        %1865 = vdwg.mxu0
        %1866 = vmatprep.subr.mxu0 0.0
        %1867 = vmatpush1.msra.mxu0 %v1721
        %1868 = vmatprep.subr.mxu0 0.0
        %1869 = vmatpush1.msra.mxu0 %v1724
        %1870 = vmatprep.subr.mxu0 0.0
        %1871 = vmatpush1.msra.mxu0 %v1727
        %1872 = vmatprep.subr.mxu0 0.0
        %1873 = vmatpush1.msra.mxu0 %v1730
        %1874 = vmatprep.subr.mxu0 0.0
        %1875 = vmatpush1.msra.mxu0 %v1733
        %1876 = vmatprep.subr.mxu0 0.0
        %1877 = vmatpush1.msra.mxu0 %v1736
        %1878 = vmatprep.subr.mxu0 0.0
        %1879 = vmatpush1.msra.mxu0 %v1739
        %1880 = vmatprep.subr.mxu0 0.0
        %1881 = vmatpush1.msra.mxu0 %v1742
        %1882 = vmatprep.subr.mxu0 0.0
        %1883 = vmatpush1.msra.mxu0 %v1745
        %1884 = vmatprep.subr.mxu0 0.0
        %1885 = vmatpush1.msra.mxu0 %v1748
        %1886 = vmatprep.subr.mxu0 0.0
        %1887 = vmatpush1.msra.mxu0 %v1751
        %1888 = vmatprep.subr.mxu0 0.0
        %1889 = vmatpush1.msra.mxu0 %v1754
        %1890 = vmatprep.subr.mxu0 0.0
        %1891 = vmatpush1.msra.mxu0 %v1757
        %1892 = vmatprep.subr.mxu0 0.0
        %1893 = vmatpush1.msra.mxu0 %v1760
        %1894 = vmatprep.subr.mxu0 0.0
        %1895 = vmatpush1.msra.mxu0 %v1763
        %1896 = vmatprep.subr.mxu0 0.0
        %1897 = vmatpush1.msra.mxu0 %v1766
        %1898 = vmatprep.subr.mxu0 0.0
        %1899 = vmatpush1.msra.mxu0 0.0
        %1900 = vmatprep.subr.mxu0 0.0
        %1901 = vmatpush1.msra.mxu0 0.0
        %1902 = vmatprep.subr.mxu0 0.0
        %1903 = vmatpush1.msra.mxu0 0.0
        %1904 = vmatprep.subr.mxu0 0.0
        %1905 = vmatpush1.msra.mxu0 0.0
        %1906 = vmatprep.subr.mxu0 0.0
        %1907 = vmatpush1.msra.mxu0 0.0
        %1908 = vmatprep.subr.mxu0 0.0
        %1909 = vmatpush1.msra.mxu0 0.0
        %1910 = vmatprep.subr.mxu0 0.0
        %1911 = vmatpush1.msra.mxu0 0.0
        %1912 = vmatprep.subr.mxu0 0.0
        %1913 = vmatpush1.msra.mxu0 0.0
        %1914 = vmatprep.subr.mxu0 0.0
        %1915 = vmatpush1.msra.mxu0 0.0
        %1916 = vmatprep.subr.mxu0 0.0
        %1917 = vmatpush1.msra.mxu0 0.0
        %1918 = vmatprep.subr.mxu0 0.0
        %1919 = vmatpush1.msra.mxu0 0.0
        %1920 = vmatprep.subr.mxu0 0.0
        %1921 = vmatpush1.msra.mxu0 0.0
        %1922 = vmatprep.subr.mxu0 0.0
        %1923 = vmatpush1.msra.mxu0 0.0
        %1924 = vmatprep.subr.mxu0 0.0
        %1925 = vmatpush1.msra.mxu0 0.0
        %1926 = vmatprep.subr.mxu0 0.0
        %1927 = vmatpush1.msra.mxu0 0.0
        %1928 = vmatprep.subr.mxu0 0.0
        %1929 = vmatpush1.msra.mxu0 0.0
        %1930 = vmatprep.mubr.f32.mxu0 0.0
        %1931 = vmatmul.mubr.f32.gmra.mrb[0].mxu0 %v1793
        %v1932 = vpop.f32.mrb[0].mxu0
        %v1933 = vadd.f32 %v1780, %v1932
        %v1934 = vpop.f32.mrb[0].mxu0
        %1935 = vdwg.mxu0
        %v1939 = vcombine.low %v1862, %v1864
        %v1941 = vunpack.c.l.s4 1983009808
        %v1942 = vunpack.c.0.s8 %v1941
        %v1943 = vlaneseq
        %v1944 = vshrl.u32 %v1943, 7
        %v1945 = vsub.s32 %v1942, %v1944
        %v1946 = vrot.slane %v1939, %v1945
        %v1948 = vunpack.c.l.s4 1983009808
        %v1949 = vunpack.c.0.s8 %v1948
        %v1950 = vlaneseq
        %v1951 = vshrl.u32 %v1950, 7
        %v1952 = vsub.s32 %v1949, %v1951
        %v1953 = vrot.slane %v1933, %v1952
        %v1954 = vcombine.low %v1946, %v1953
        %v1955 = vcombine.high %v1946, %v1953
        %1958 = vst [vmem:[%s220] sm:$0x3f] %v1954
        %1959 = vst [vmem:[%s220 + $0x6] sm:$0x3f] %v1955
        %s1960 = sand.u32 %s137, 1
        %s1961 = scalar_lea.sflag [#allocation3], %s1960
        %s1962 = sand.u32 %s137, 1
        %s1963 = smul.addr %s1962, 12
        %s1964 = scalar_lea.vmem [#allocation2], %s1963
        // Predicated region
        $region41: #{encoder_cnn_forward.1} parent=39 // pred_check
          %p1965 = pneg %p147
        $region42: #{encoder_cnn_forward.1} parent=39 // pred_check_branch
          %1967 = sbr.rel (%p1965) target = $region44
        $region43: #{encoder_cnn_forward.1} parent=39 // pred_region
          %s1968 = smul.u32 2, %s19
          %s1970 = ssub.s32 192, 192
          %1971 = vsyncadd %s1961, %s1970
          %s1972 = smul.addr %s1968, 3
          %s1973 = smul.addr %s1972, 32
          %s1974 = scalar_lea.hbm %s5, %s1973
          %s1975 = sshll.u32 %s1964, 4
          %s1976 = int_to_ptr.vmem [resolvable:$true] %s1975
          %1981 = dma.vmem_to_hbm [thread:$0]  %s1976, 192, %s1974, %s1961, 96, 96, 6
        $region44: #{encoder_cnn_forward.1} parent=39 // pred_fallthru
          _
      $region40: #{encoder_cnn_forward.1} parent=5 // pred_fallthru
        _
      %p1982 = scmp.le.s32.totalorder 2, %s14
      // Predicated region
      $region45: #{encoder_cnn_forward.1} parent=5 // pred_check
        %p1983 = pneg %p1982
      $region46: #{encoder_cnn_forward.1} parent=5 // pred_check_branch
        %1985 = sbr.rel (%p1983) target = $region48
      $region47: #{encoder_cnn_forward.1} parent=5 // pred_region
        %s1986 = ssub.s32 %s14, 2
        // Predicated region
        $region49: #{encoder_cnn_forward.1} parent=47 // pred_check
          %p1987 = pneg %p153
        $region50: #{encoder_cnn_forward.1} parent=47 // pred_check_branch
          %1989 = sbr.rel (%p1987) target = $region52
        $region51: #{encoder_cnn_forward.1} parent=47 // pred_region
          %s1990 = sand.u32 %s138, 1
          %s1991 = scalar_lea.sflag [#allocation3], %s1990
          %s1992 = sand.u32 %s138, 1
          %s1993 = smul.addr %s1992, 12
          %s1994 = scalar_lea.vmem [#allocation2], %s1993
          %1995 = dma.done %s1991, 192
        $region52: #{encoder_cnn_forward.1} parent=47 // pred_fallthru
          _
      $region48: #{encoder_cnn_forward.1} parent=5 // pred_fallthru
        _
    $region6: #{encoder_cnn_forward.1} parent=1 // loop_footer
      %s18 = sadd.s32 1, %s14
    $region7: #{encoder_cnn_forward.1} parent=1 // loop_footer_branch
      %13 = sbr.rel target = $region3
    $region8: #{encoder_cnn_forward.1} parent=1 // loop_exit
      _
    %1996 = vsyncpa [#allocation3], 1
    %s1997 = scalar_lea.sflag [#allocation3], 1
    %1998 = vsyncpa %s1997, 1

</llo_original>
